<compile_context>
chip_gen: v5e
topology: v5e:2x2
jax: 0.10.0
libtpu: 0.0.40
codegen_flags: <defaults>
</compile_context>

<pallas_src>
import functools

import jax
import jax.numpy as jnp
from jax.experimental import pallas as pl
from jax.experimental.pallas import tpu as pltpu


# ----------------------------------------------------------------------------
# Fused Pallas kernel: embedding-projected sequence -> LSTM stack -> fc / fc2
# ----------------------------------------------------------------------------
def _fused_forward_kernel(n_layers, *refs):
    """Inputs : embed (B,T,D0), h0 (L,B,H), c0 (L,B,H),
                [w_l (D_in+H,4H), b_l (1,4H)] * n_layers,
                fc_w (H,E), fc_b (1,E), fc2_w (D0,O2), fc2_b (1,O2)
       Outputs: logits_event (B,T,E), logits_time (B,T,O2),
                h_T (L,B,H), c_T (L,B,H)."""
    embed_ref, h0_ref, c0_ref = refs[:3]
    rest = refs[3:]
    lstm_refs = rest[:2 * n_layers]
    fc_w_ref, fc_b_ref, fc2_w_ref, fc2_b_ref = rest[2 * n_layers:2 * n_layers + 4]
    ev_ref, tm_ref, ht_ref, ct_ref = rest[2 * n_layers + 4:]

    B, T, _ = embed_ref.shape
    H = h0_ref.shape[-1]

    # Per-timestep inputs of the current layer. Static fully-unrolled loops
    # (T=8): equivalent to lax.fori_loop(..., unroll=True), no grid-step cost.
    seq = [embed_ref[:, t, :] for t in range(T)]

    for l in range(n_layers):
        w = lstm_refs[2 * l][...]       # (D_in + H, 4H), gate cols (i, f, o, g)
        b = lstm_refs[2 * l + 1][...]   # (1, 4H)
        h = h0_ref[l]                   # (B, H)
        c = c0_ref[l]                   # (B, H)
        outs = []
        for t in range(T):
            # Single fused matmul per step: [x_t | h_{t-1}] @ [W_ih ; W_hh]
            xh = jnp.concatenate([seq[t], h], axis=-1)           # (B, D_in+H)
            gates = jnp.dot(xh, w, preferred_element_type=jnp.float32) + b
            sig = jax.nn.sigmoid(gates[:, :3 * H])               # i | f | o
            g = jnp.tanh(gates[:, 3 * H:])                       # g
            i_g = sig[:, 0 * H:1 * H]
            f_g = sig[:, 1 * H:2 * H]
            o_g = sig[:, 2 * H:3 * H]
            c = f_g * c + i_g * g
            h = o_g * jnp.tanh(c)
            outs.append(h)
        seq = outs
        # Final state written once per layer (last timestep only).
        ht_ref[l] = h
        ct_ref[l] = c

    # FC heads fused into the same kernel (no extra launches, batch-first out).
    fc_w = fc_w_ref[...]
    fc_b = fc_b_ref[...]
    fc2_w = fc2_w_ref[...]
    fc2_b = fc2_b_ref[...]
    for t in range(T):
        ev_ref[:, t, :] = (jnp.dot(seq[t], fc_w,
                                   preferred_element_type=jnp.float32) + fc_b)
        tm_ref[:, t, :] = (jnp.dot(embed_ref[:, t, :], fc2_w,
                                   preferred_element_type=jnp.float32) + fc2_b)


def _fused_forward(embed, h0, c0, lstm_params, fc_w, fc_b, fc2_w, fc2_b):
    n_layers, B, H = h0.shape
    T = embed.shape[1]
    E = fc_w.shape[-1]
    O2 = fc2_w.shape[-1]

    flat_lstm = []
    for p in lstm_params:
        flat_lstm += [p["w"], p["b"]]
    n_in = 3 + len(flat_lstm) + 4

    vmem_spec = pl.BlockSpec(memory_space=pltpu.MemorySpace.VMEM)
    return pl.pallas_call(
        functools.partial(_fused_forward_kernel, n_layers),
        out_shape=(jax.ShapeDtypeStruct((B, T, E), jnp.float32),
                   jax.ShapeDtypeStruct((B, T, O2), jnp.float32),
                   jax.ShapeDtypeStruct((n_layers, B, H), jnp.float32),
                   jax.ShapeDtypeStruct((n_layers, B, H), jnp.float32)),
        in_specs=[vmem_spec] * n_in,
        out_specs=(vmem_spec,) * 4,
    )(embed, h0, c0, *flat_lstm, fc_w, fc_b, fc2_w, fc2_b)


# ----------------------------------------------------------------------------
# Parameters (kernel-ready packed layout) + forward
# ----------------------------------------------------------------------------
def _reorder_gates(p, axis=0):
    """(i, f, g, o) -> (i, f, o, g) along `axis`."""
    i, f, g, o = jnp.split(p, 4, axis=axis)
    return jnp.concatenate([i, f, o, g], axis=axis)


def init_params(key, input_size, n_input_fields, output_event_size,
                output_time_size, lstm_size, embedding_dim, n_layers):
    d_in0 = n_input_fields * embedding_dim
    H = lstm_size
    keys = jax.random.split(key, 5 + 4 * n_layers)
    params = {
        "embedding": 0.1 * jax.random.normal(
            keys[0], (input_size, embedding_dim), jnp.float32),
        "fc_w": 0.1 * jax.random.normal(
            keys[1], (H, output_event_size), jnp.float32),
        "fc_b": jax.random.normal(keys[2], (1, output_event_size), jnp.float32),
        "fc2_w": 0.1 * jax.random.normal(
            keys[3], (d_in0, output_time_size), jnp.float32),
        "fc2_b": jax.random.normal(keys[4], (1, output_time_size), jnp.float32),
        "lstm": [],
    }
    kidx = 5
    for l in range(n_layers):
        d_in = d_in0 if l == 0 else H
        k0, k1, k2, k3 = keys[kidx:kidx + 4]
        kidx += 4
        # PyTorch-layout random params (rows in gate order i, f, g, o) ...
        w_ih = 0.1 * jax.random.normal(k0, (4 * H, d_in), jnp.float32)
        w_hh = 0.1 * jax.random.normal(k1, (4 * H, H), jnp.float32)
        b_ih = 0.1 * jax.random.normal(k2, (4 * H,), jnp.float32)
        b_hh = 0.1 * jax.random.normal(k3, (4 * H,), jnp.float32)
        # ... packed once (host side) into the kernel layout: stacked weight,
        # gate columns reordered to (i, f, o, g), combined bias.
        w = jnp.transpose(jnp.concatenate(
            [_reorder_gates(w_ih), _reorder_gates(w_hh)], axis=1))  # (d_in+H, 4H)
        b = _reorder_gates(b_ih + b_hh).reshape(1, 4 * H)
        params["lstm"].append({"w": w, "b": b})
    return params


def init_state(n_layers, batch_size, lstm_size):
    z = jnp.zeros((n_layers, batch_size, lstm_size), jnp.float32)
    return (z, z)


@jax.jit
def model_forward(params, x, state):
    # Embedding lookup (data-dependent gather) kept as a single XLA op.
    emb = jnp.take(params["embedding"], x, axis=0)           # (B, T, F, E)
    B, T = x.shape[0], x.shape[1]
    embed = emb.reshape(B, T, -1)                            # (B, T, F*E)
    h0, c0 = state
    # fc2 is applied to embed.detach(); detach has no forward effect.
    ev, tm, ht, ct = _fused_forward(embed, h0, c0, params["lstm"],
                                    params["fc_w"], params["fc_b"],
                                    params["fc2_w"], params["fc2_b"])
    return ev, tm, (ht, ct)


# ----------------------------------------------------------------------------
# Pure-JAX reference (same packed-weight math) for a sanity check
# ----------------------------------------------------------------------------
def reference_forward(params, x, state):
    emb = jnp.take(params["embedding"], x, axis=0)
    B, T = x.shape[0], x.shape[1]
    embed = emb.reshape(B, T, -1)
    h_all, c_all = state
    H = h_all.shape[-1]
    seq = embed
    hT, cT = [], []
    for l, p in enumerate(params["lstm"]):
        h, c = h_all[l], c_all[l]
        outs = []
        for t in range(T):
            xh = jnp.concatenate([seq[:, t, :], h], axis=-1)
            gates = xh @ p["w"] + p["b"]
            i = jax.nn.sigmoid(gates[:, 0 * H:1 * H])
            f = jax.nn.sigmoid(gates[:, 1 * H:2 * H])
            o = jax.nn.sigmoid(gates[:, 2 * H:3 * H])
            g = jnp.tanh(gates[:, 3 * H:4 * H])
            c = f * c + i * g
            h = o * jnp.tanh(c)
            outs.append(h)
        seq = jnp.stack(outs, axis=1)
        hT.append(h)
        cT.append(c)
    ev = seq @ params["fc_w"] + params["fc_b"]
    tm = embed @ params["fc2_w"] + params["fc2_b"]
    return ev, tm, (jnp.stack(hT, axis=0), jnp.stack(cT, axis=0))


# ----------------------------------------------------------------------------
if __name__ == "__main__":
    input_size = 50          # vocab size for the embedding
    n_input_fields = 4
    embedding_dim = 8
    lstm_size = 32
    n_layers = 2
    output_event_size = 16
    output_time_size = 8
    batch = 2
    seq_len = 8

    key = jax.random.PRNGKey(0)
    pkey, xkey = jax.random.split(key)
    params = init_params(pkey, input_size, n_input_fields, output_event_size,
                         output_time_size, lstm_size, embedding_dim, n_layers)

    x = jax.random.randint(xkey, (batch, seq_len, n_input_fields),
                           0, input_size, dtype=jnp.int32)
    state = init_state(n_layers, batch, lstm_size)

    logits_event, logits_time, (state_h, state_c) = model_forward(params, x, state)
    jax.block_until_ready((logits_event, logits_time, state_h, state_c))

    assert logits_event.shape == (batch, seq_len, output_event_size)
    assert logits_time.shape == (batch, seq_len, output_time_size)
    assert state_h.shape == (n_layers, batch, lstm_size)
    assert state_c.shape == (n_layers, batch, lstm_size)

    # Numerical sanity check vs. pure-JAX reference (loose tol: default TPU
    # matmul precision differs slightly between Pallas and XLA lowerings).
    ev_r, tm_r, (ht_r, ct_r) = reference_forward(params, x, state)
    for a, b in ((logits_event, ev_r), (logits_time, tm_r),
                 (state_h, ht_r), (state_c, ct_r)):
        assert jnp.allclose(a, b, atol=2e-2, rtol=2e-2), \
            float(jnp.max(jnp.abs(a - b)))

    print("KERNEL_OK")
</pallas_src>

<mosaic_0001>
module attributes {stable_mosaic.version = 11 : i64} {
  func.func @_fused_forward_kernel(%arg0: memref<2x8x32xf32, #tpu.memory_space<vmem>>, %arg1: memref<2x2x32xf32, #tpu.memory_space<vmem>>, %arg2: memref<2x2x32xf32, #tpu.memory_space<vmem>>, %arg3: memref<64x128xf32, #tpu.memory_space<vmem>>, %arg4: memref<1x128xf32, #tpu.memory_space<vmem>>, %arg5: memref<64x128xf32, #tpu.memory_space<vmem>>, %arg6: memref<1x128xf32, #tpu.memory_space<vmem>>, %arg7: memref<32x16xf32, #tpu.memory_space<vmem>>, %arg8: memref<1x16xf32, #tpu.memory_space<vmem>>, %arg9: memref<32x8xf32, #tpu.memory_space<vmem>>, %arg10: memref<1x8xf32, #tpu.memory_space<vmem>>, %arg11: memref<2x8x16xf32, #tpu.memory_space<vmem>>, %arg12: memref<2x8x8xf32, #tpu.memory_space<vmem>>, %arg13: memref<2x2x32xf32, #tpu.memory_space<vmem>>, %arg14: memref<2x2x32xf32, #tpu.memory_space<vmem>>) attributes {dimension_semantics = [], scalar_prefetch = 0 : i64, scratch_operands = 0 : i64, tpu.core_type = #tpu.core_type<tc>} {
    %c0 = arith.constant 0 : index
    %c0_0 = arith.constant 0 : index
    %c0_1 = arith.constant 0 : index
    %0 = vector.load %arg0[%c0, %c0_0, %c0_1] : memref<2x8x32xf32, #tpu.memory_space<vmem>>, vector<2x1x32xf32>
    %1 = vector.shape_cast %0 : vector<2x1x32xf32> to vector<2x32xf32>
    %c0_2 = arith.constant 0 : index
    %c1 = arith.constant 1 : index
    %c0_3 = arith.constant 0 : index
    %2 = vector.load %arg0[%c0_2, %c1, %c0_3] : memref<2x8x32xf32, #tpu.memory_space<vmem>>, vector<2x1x32xf32>
    %3 = vector.shape_cast %2 : vector<2x1x32xf32> to vector<2x32xf32>
    %c0_4 = arith.constant 0 : index
    %c2 = arith.constant 2 : index
    %c0_5 = arith.constant 0 : index
    %4 = vector.load %arg0[%c0_4, %c2, %c0_5] : memref<2x8x32xf32, #tpu.memory_space<vmem>>, vector<2x1x32xf32>
    %5 = vector.shape_cast %4 : vector<2x1x32xf32> to vector<2x32xf32>
    %c0_6 = arith.constant 0 : index
    %c3 = arith.constant 3 : index
    %c0_7 = arith.constant 0 : index
    %6 = vector.load %arg0[%c0_6, %c3, %c0_7] : memref<2x8x32xf32, #tpu.memory_space<vmem>>, vector<2x1x32xf32>
    %7 = vector.shape_cast %6 : vector<2x1x32xf32> to vector<2x32xf32>
    %c0_8 = arith.constant 0 : index
    %c4 = arith.constant 4 : index
    %c0_9 = arith.constant 0 : index
    %8 = vector.load %arg0[%c0_8, %c4, %c0_9] : memref<2x8x32xf32, #tpu.memory_space<vmem>>, vector<2x1x32xf32>
    %9 = vector.shape_cast %8 : vector<2x1x32xf32> to vector<2x32xf32>
    %c0_10 = arith.constant 0 : index
    %c5 = arith.constant 5 : index
    %c0_11 = arith.constant 0 : index
    %10 = vector.load %arg0[%c0_10, %c5, %c0_11] : memref<2x8x32xf32, #tpu.memory_space<vmem>>, vector<2x1x32xf32>
    %11 = vector.shape_cast %10 : vector<2x1x32xf32> to vector<2x32xf32>
    %c0_12 = arith.constant 0 : index
    %c6 = arith.constant 6 : index
    %c0_13 = arith.constant 0 : index
    %12 = vector.load %arg0[%c0_12, %c6, %c0_13] : memref<2x8x32xf32, #tpu.memory_space<vmem>>, vector<2x1x32xf32>
    %13 = vector.shape_cast %12 : vector<2x1x32xf32> to vector<2x32xf32>
    %c0_14 = arith.constant 0 : index
    %c7 = arith.constant 7 : index
    %c0_15 = arith.constant 0 : index
    %14 = vector.load %arg0[%c0_14, %c7, %c0_15] : memref<2x8x32xf32, #tpu.memory_space<vmem>>, vector<2x1x32xf32>
    %15 = vector.shape_cast %14 : vector<2x1x32xf32> to vector<2x32xf32>
    %c0_16 = arith.constant 0 : index
    %c0_17 = arith.constant 0 : index
    %16 = vector.load %arg3[%c0_16, %c0_17] : memref<64x128xf32, #tpu.memory_space<vmem>>, vector<64x128xf32>
    %c0_18 = arith.constant 0 : index
    %c0_19 = arith.constant 0 : index
    %17 = vector.load %arg4[%c0_18, %c0_19] : memref<1x128xf32, #tpu.memory_space<vmem>>, vector<1x128xf32>
    %c0_20 = arith.constant 0 : index
    %c0_21 = arith.constant 0 : index
    %c0_22 = arith.constant 0 : index
    %18 = vector.load %arg1[%c0_20, %c0_21, %c0_22] : memref<2x2x32xf32, #tpu.memory_space<vmem>>, vector<1x2x32xf32>
    %19 = vector.shape_cast %18 : vector<1x2x32xf32> to vector<2x32xf32>
    %c0_23 = arith.constant 0 : index
    %c0_24 = arith.constant 0 : index
    %c0_25 = arith.constant 0 : index
    %20 = vector.load %arg2[%c0_23, %c0_24, %c0_25] : memref<2x2x32xf32, #tpu.memory_space<vmem>>, vector<1x2x32xf32>
    %21 = vector.shape_cast %20 : vector<1x2x32xf32> to vector<2x32xf32>
    %22 = tpu.concatenate %1, %19 in 1 : vector<2x32xf32>, vector<2x32xf32> -> vector<2x64xf32>
    %cst = arith.constant dense<0.000000e+00> : vector<2x128xf32>
    %23 = tpu.matmul %22, %16, %cst {dimension_numbers = #tpu.dot_dimension_numbers<[1], [0], [0], [1], [0, 0, 1, 1], [], []>} : vector<2x64xf32>, vector<64x128xf32>, vector<2x128xf32> -> vector<2x128xf32>
    %24 = vector.broadcast %17 : vector<1x128xf32> to vector<2x128xf32>
    %25 = arith.addf %23, %24 : vector<2x128xf32>
    %26 = vector.extract_strided_slice %25 {offsets = [0, 0], sizes = [2, 96], strides = [1, 1]} : vector<2x128xf32> to vector<2x96xf32>
    %27 = arith.negf %26 : vector<2x96xf32>
    %28 = math.exp %27 : vector<2x96xf32>
    %cst_26 = arith.constant 1.000000e+00 : f32
    %29 = vector.broadcast %cst_26 : f32 to vector<2x96xf32>
    %30 = arith.addf %29, %28 : vector<2x96xf32>
    %31 = arith.divf %29, %30 : vector<2x96xf32>
    %32 = vector.extract_strided_slice %25 {offsets = [0, 96], sizes = [2, 32], strides = [1, 1]} : vector<2x128xf32> to vector<2x32xf32>
    %33 = math.tanh %32 : vector<2x32xf32>
    %34 = vector.extract_strided_slice %31 {offsets = [0, 0], sizes = [2, 32], strides = [1, 1]} : vector<2x96xf32> to vector<2x32xf32>
    %35 = vector.extract_strided_slice %31 {offsets = [0, 32], sizes = [2, 32], strides = [1, 1]} : vector<2x96xf32> to vector<2x32xf32>
    %36 = vector.extract_strided_slice %31 {offsets = [0, 64], sizes = [2, 32], strides = [1, 1]} : vector<2x96xf32> to vector<2x32xf32>
    %37 = arith.mulf %35, %21 : vector<2x32xf32>
    %38 = arith.mulf %34, %33 : vector<2x32xf32>
    %39 = arith.addf %37, %38 : vector<2x32xf32>
    %40 = math.tanh %39 : vector<2x32xf32>
    %41 = arith.mulf %36, %40 : vector<2x32xf32>
    %42 = tpu.concatenate %3, %41 in 1 : vector<2x32xf32>, vector<2x32xf32> -> vector<2x64xf32>
    %cst_27 = arith.constant dense<0.000000e+00> : vector<2x128xf32>
    %43 = tpu.matmul %42, %16, %cst_27 {dimension_numbers = #tpu.dot_dimension_numbers<[1], [0], [0], [1], [0, 0, 1, 1], [], []>} : vector<2x64xf32>, vector<64x128xf32>, vector<2x128xf32> -> vector<2x128xf32>
    %44 = vector.broadcast %17 : vector<1x128xf32> to vector<2x128xf32>
    %45 = arith.addf %43, %44 : vector<2x128xf32>
    %46 = vector.extract_strided_slice %45 {offsets = [0, 0], sizes = [2, 96], strides = [1, 1]} : vector<2x128xf32> to vector<2x96xf32>
    %47 = arith.negf %46 : vector<2x96xf32>
    %48 = math.exp %47 : vector<2x96xf32>
    %cst_28 = arith.constant 1.000000e+00 : f32
    %49 = vector.broadcast %cst_28 : f32 to vector<2x96xf32>
    %50 = arith.addf %49, %48 : vector<2x96xf32>
    %51 = arith.divf %49, %50 : vector<2x96xf32>
    %52 = vector.extract_strided_slice %45 {offsets = [0, 96], sizes = [2, 32], strides = [1, 1]} : vector<2x128xf32> to vector<2x32xf32>
    %53 = math.tanh %52 : vector<2x32xf32>
    %54 = vector.extract_strided_slice %51 {offsets = [0, 0], sizes = [2, 32], strides = [1, 1]} : vector<2x96xf32> to vector<2x32xf32>
    %55 = vector.extract_strided_slice %51 {offsets = [0, 32], sizes = [2, 32], strides = [1, 1]} : vector<2x96xf32> to vector<2x32xf32>
    %56 = vector.extract_strided_slice %51 {offsets = [0, 64], sizes = [2, 32], strides = [1, 1]} : vector<2x96xf32> to vector<2x32xf32>
    %57 = arith.mulf %55, %39 : vector<2x32xf32>
    %58 = arith.mulf %54, %53 : vector<2x32xf32>
    %59 = arith.addf %57, %58 : vector<2x32xf32>
    %60 = math.tanh %59 : vector<2x32xf32>
    %61 = arith.mulf %56, %60 : vector<2x32xf32>
    %62 = tpu.concatenate %5, %61 in 1 : vector<2x32xf32>, vector<2x32xf32> -> vector<2x64xf32>
    %cst_29 = arith.constant dense<0.000000e+00> : vector<2x128xf32>
    %63 = tpu.matmul %62, %16, %cst_29 {dimension_numbers = #tpu.dot_dimension_numbers<[1], [0], [0], [1], [0, 0, 1, 1], [], []>} : vector<2x64xf32>, vector<64x128xf32>, vector<2x128xf32> -> vector<2x128xf32>
    %64 = vector.broadcast %17 : vector<1x128xf32> to vector<2x128xf32>
    %65 = arith.addf %63, %64 : vector<2x128xf32>
    %66 = vector.extract_strided_slice %65 {offsets = [0, 0], sizes = [2, 96], strides = [1, 1]} : vector<2x128xf32> to vector<2x96xf32>
    %67 = arith.negf %66 : vector<2x96xf32>
    %68 = math.exp %67 : vector<2x96xf32>
    %cst_30 = arith.constant 1.000000e+00 : f32
    %69 = vector.broadcast %cst_30 : f32 to vector<2x96xf32>
    %70 = arith.addf %69, %68 : vector<2x96xf32>
    %71 = arith.divf %69, %70 : vector<2x96xf32>
    %72 = vector.extract_strided_slice %65 {offsets = [0, 96], sizes = [2, 32], strides = [1, 1]} : vector<2x128xf32> to vector<2x32xf32>
    %73 = math.tanh %72 : vector<2x32xf32>
    %74 = vector.extract_strided_slice %71 {offsets = [0, 0], sizes = [2, 32], strides = [1, 1]} : vector<2x96xf32> to vector<2x32xf32>
    %75 = vector.extract_strided_slice %71 {offsets = [0, 32], sizes = [2, 32], strides = [1, 1]} : vector<2x96xf32> to vector<2x32xf32>
    %76 = vector.extract_strided_slice %71 {offsets = [0, 64], sizes = [2, 32], strides = [1, 1]} : vector<2x96xf32> to vector<2x32xf32>
    %77 = arith.mulf %75, %59 : vector<2x32xf32>
    %78 = arith.mulf %74, %73 : vector<2x32xf32>
    %79 = arith.addf %77, %78 : vector<2x32xf32>
    %80 = math.tanh %79 : vector<2x32xf32>
    %81 = arith.mulf %76, %80 : vector<2x32xf32>
    %82 = tpu.concatenate %7, %81 in 1 : vector<2x32xf32>, vector<2x32xf32> -> vector<2x64xf32>
    %cst_31 = arith.constant dense<0.000000e+00> : vector<2x128xf32>
    %83 = tpu.matmul %82, %16, %cst_31 {dimension_numbers = #tpu.dot_dimension_numbers<[1], [0], [0], [1], [0, 0, 1, 1], [], []>} : vector<2x64xf32>, vector<64x128xf32>, vector<2x128xf32> -> vector<2x128xf32>
    %84 = vector.broadcast %17 : vector<1x128xf32> to vector<2x128xf32>
    %85 = arith.addf %83, %84 : vector<2x128xf32>
    %86 = vector.extract_strided_slice %85 {offsets = [0, 0], sizes = [2, 96], strides = [1, 1]} : vector<2x128xf32> to vector<2x96xf32>
    %87 = arith.negf %86 : vector<2x96xf32>
    %88 = math.exp %87 : vector<2x96xf32>
    %cst_32 = arith.constant 1.000000e+00 : f32
    %89 = vector.broadcast %cst_32 : f32 to vector<2x96xf32>
    %90 = arith.addf %89, %88 : vector<2x96xf32>
    %91 = arith.divf %89, %90 : vector<2x96xf32>
    %92 = vector.extract_strided_slice %85 {offsets = [0, 96], sizes = [2, 32], strides = [1, 1]} : vector<2x128xf32> to vector<2x32xf32>
    %93 = math.tanh %92 : vector<2x32xf32>
    %94 = vector.extract_strided_slice %91 {offsets = [0, 0], sizes = [2, 32], strides = [1, 1]} : vector<2x96xf32> to vector<2x32xf32>
    %95 = vector.extract_strided_slice %91 {offsets = [0, 32], sizes = [2, 32], strides = [1, 1]} : vector<2x96xf32> to vector<2x32xf32>
    %96 = vector.extract_strided_slice %91 {offsets = [0, 64], sizes = [2, 32], strides = [1, 1]} : vector<2x96xf32> to vector<2x32xf32>
    %97 = arith.mulf %95, %79 : vector<2x32xf32>
    %98 = arith.mulf %94, %93 : vector<2x32xf32>
    %99 = arith.addf %97, %98 : vector<2x32xf32>
    %100 = math.tanh %99 : vector<2x32xf32>
    %101 = arith.mulf %96, %100 : vector<2x32xf32>
    %102 = tpu.concatenate %9, %101 in 1 : vector<2x32xf32>, vector<2x32xf32> -> vector<2x64xf32>
    %cst_33 = arith.constant dense<0.000000e+00> : vector<2x128xf32>
    %103 = tpu.matmul %102, %16, %cst_33 {dimension_numbers = #tpu.dot_dimension_numbers<[1], [0], [0], [1], [0, 0, 1, 1], [], []>} : vector<2x64xf32>, vector<64x128xf32>, vector<2x128xf32> -> vector<2x128xf32>
    %104 = vector.broadcast %17 : vector<1x128xf32> to vector<2x128xf32>
    %105 = arith.addf %103, %104 : vector<2x128xf32>
    %106 = vector.extract_strided_slice %105 {offsets = [0, 0], sizes = [2, 96], strides = [1, 1]} : vector<2x128xf32> to vector<2x96xf32>
    %107 = arith.negf %106 : vector<2x96xf32>
    %108 = math.exp %107 : vector<2x96xf32>
    %cst_34 = arith.constant 1.000000e+00 : f32
    %109 = vector.broadcast %cst_34 : f32 to vector<2x96xf32>
    %110 = arith.addf %109, %108 : vector<2x96xf32>
    %111 = arith.divf %109, %110 : vector<2x96xf32>
    %112 = vector.extract_strided_slice %105 {offsets = [0, 96], sizes = [2, 32], strides = [1, 1]} : vector<2x128xf32> to vector<2x32xf32>
    %113 = math.tanh %112 : vector<2x32xf32>
    %114 = vector.extract_strided_slice %111 {offsets = [0, 0], sizes = [2, 32], strides = [1, 1]} : vector<2x96xf32> to vector<2x32xf32>
    %115 = vector.extract_strided_slice %111 {offsets = [0, 32], sizes = [2, 32], strides = [1, 1]} : vector<2x96xf32> to vector<2x32xf32>
    %116 = vector.extract_strided_slice %111 {offsets = [0, 64], sizes = [2, 32], strides = [1, 1]} : vector<2x96xf32> to vector<2x32xf32>
    %117 = arith.mulf %115, %99 : vector<2x32xf32>
    %118 = arith.mulf %114, %113 : vector<2x32xf32>
    %119 = arith.addf %117, %118 : vector<2x32xf32>
    %120 = math.tanh %119 : vector<2x32xf32>
    %121 = arith.mulf %116, %120 : vector<2x32xf32>
    %122 = tpu.concatenate %11, %121 in 1 : vector<2x32xf32>, vector<2x32xf32> -> vector<2x64xf32>
    %cst_35 = arith.constant dense<0.000000e+00> : vector<2x128xf32>
    %123 = tpu.matmul %122, %16, %cst_35 {dimension_numbers = #tpu.dot_dimension_numbers<[1], [0], [0], [1], [0, 0, 1, 1], [], []>} : vector<2x64xf32>, vector<64x128xf32>, vector<2x128xf32> -> vector<2x128xf32>
    %124 = vector.broadcast %17 : vector<1x128xf32> to vector<2x128xf32>
    %125 = arith.addf %123, %124 : vector<2x128xf32>
    %126 = vector.extract_strided_slice %125 {offsets = [0, 0], sizes = [2, 96], strides = [1, 1]} : vector<2x128xf32> to vector<2x96xf32>
    %127 = arith.negf %126 : vector<2x96xf32>
    %128 = math.exp %127 : vector<2x96xf32>
    %cst_36 = arith.constant 1.000000e+00 : f32
    %129 = vector.broadcast %cst_36 : f32 to vector<2x96xf32>
    %130 = arith.addf %129, %128 : vector<2x96xf32>
    %131 = arith.divf %129, %130 : vector<2x96xf32>
    %132 = vector.extract_strided_slice %125 {offsets = [0, 96], sizes = [2, 32], strides = [1, 1]} : vector<2x128xf32> to vector<2x32xf32>
    %133 = math.tanh %132 : vector<2x32xf32>
    %134 = vector.extract_strided_slice %131 {offsets = [0, 0], sizes = [2, 32], strides = [1, 1]} : vector<2x96xf32> to vector<2x32xf32>
    %135 = vector.extract_strided_slice %131 {offsets = [0, 32], sizes = [2, 32], strides = [1, 1]} : vector<2x96xf32> to vector<2x32xf32>
    %136 = vector.extract_strided_slice %131 {offsets = [0, 64], sizes = [2, 32], strides = [1, 1]} : vector<2x96xf32> to vector<2x32xf32>
    %137 = arith.mulf %135, %119 : vector<2x32xf32>
    %138 = arith.mulf %134, %133 : vector<2x32xf32>
    %139 = arith.addf %137, %138 : vector<2x32xf32>
    %140 = math.tanh %139 : vector<2x32xf32>
    %141 = arith.mulf %136, %140 : vector<2x32xf32>
    %142 = tpu.concatenate %13, %141 in 1 : vector<2x32xf32>, vector<2x32xf32> -> vector<2x64xf32>
    %cst_37 = arith.constant dense<0.000000e+00> : vector<2x128xf32>
    %143 = tpu.matmul %142, %16, %cst_37 {dimension_numbers = #tpu.dot_dimension_numbers<[1], [0], [0], [1], [0, 0, 1, 1], [], []>} : vector<2x64xf32>, vector<64x128xf32>, vector<2x128xf32> -> vector<2x128xf32>
    %144 = vector.broadcast %17 : vector<1x128xf32> to vector<2x128xf32>
    %145 = arith.addf %143, %144 : vector<2x128xf32>
    %146 = vector.extract_strided_slice %145 {offsets = [0, 0], sizes = [2, 96], strides = [1, 1]} : vector<2x128xf32> to vector<2x96xf32>
    %147 = arith.negf %146 : vector<2x96xf32>
    %148 = math.exp %147 : vector<2x96xf32>
    %cst_38 = arith.constant 1.000000e+00 : f32
    %149 = vector.broadcast %cst_38 : f32 to vector<2x96xf32>
    %150 = arith.addf %149, %148 : vector<2x96xf32>
    %151 = arith.divf %149, %150 : vector<2x96xf32>
    %152 = vector.extract_strided_slice %145 {offsets = [0, 96], sizes = [2, 32], strides = [1, 1]} : vector<2x128xf32> to vector<2x32xf32>
    %153 = math.tanh %152 : vector<2x32xf32>
    %154 = vector.extract_strided_slice %151 {offsets = [0, 0], sizes = [2, 32], strides = [1, 1]} : vector<2x96xf32> to vector<2x32xf32>
    %155 = vector.extract_strided_slice %151 {offsets = [0, 32], sizes = [2, 32], strides = [1, 1]} : vector<2x96xf32> to vector<2x32xf32>
    %156 = vector.extract_strided_slice %151 {offsets = [0, 64], sizes = [2, 32], strides = [1, 1]} : vector<2x96xf32> to vector<2x32xf32>
    %157 = arith.mulf %155, %139 : vector<2x32xf32>
    %158 = arith.mulf %154, %153 : vector<2x32xf32>
    %159 = arith.addf %157, %158 : vector<2x32xf32>
    %160 = math.tanh %159 : vector<2x32xf32>
    %161 = arith.mulf %156, %160 : vector<2x32xf32>
    %162 = tpu.concatenate %15, %161 in 1 : vector<2x32xf32>, vector<2x32xf32> -> vector<2x64xf32>
    %cst_39 = arith.constant dense<0.000000e+00> : vector<2x128xf32>
    %163 = tpu.matmul %162, %16, %cst_39 {dimension_numbers = #tpu.dot_dimension_numbers<[1], [0], [0], [1], [0, 0, 1, 1], [], []>} : vector<2x64xf32>, vector<64x128xf32>, vector<2x128xf32> -> vector<2x128xf32>
    %164 = vector.broadcast %17 : vector<1x128xf32> to vector<2x128xf32>
    %165 = arith.addf %163, %164 : vector<2x128xf32>
    %166 = vector.extract_strided_slice %165 {offsets = [0, 0], sizes = [2, 96], strides = [1, 1]} : vector<2x128xf32> to vector<2x96xf32>
    %167 = arith.negf %166 : vector<2x96xf32>
    %168 = math.exp %167 : vector<2x96xf32>
    %cst_40 = arith.constant 1.000000e+00 : f32
    %169 = vector.broadcast %cst_40 : f32 to vector<2x96xf32>
    %170 = arith.addf %169, %168 : vector<2x96xf32>
    %171 = arith.divf %169, %170 : vector<2x96xf32>
    %172 = vector.extract_strided_slice %165 {offsets = [0, 96], sizes = [2, 32], strides = [1, 1]} : vector<2x128xf32> to vector<2x32xf32>
    %173 = math.tanh %172 : vector<2x32xf32>
    %174 = vector.extract_strided_slice %171 {offsets = [0, 0], sizes = [2, 32], strides = [1, 1]} : vector<2x96xf32> to vector<2x32xf32>
    %175 = vector.extract_strided_slice %171 {offsets = [0, 32], sizes = [2, 32], strides = [1, 1]} : vector<2x96xf32> to vector<2x32xf32>
    %176 = vector.extract_strided_slice %171 {offsets = [0, 64], sizes = [2, 32], strides = [1, 1]} : vector<2x96xf32> to vector<2x32xf32>
    %177 = arith.mulf %175, %159 : vector<2x32xf32>
    %178 = arith.mulf %174, %173 : vector<2x32xf32>
    %179 = arith.addf %177, %178 : vector<2x32xf32>
    %180 = math.tanh %179 : vector<2x32xf32>
    %181 = arith.mulf %176, %180 : vector<2x32xf32>
    %c0_41 = arith.constant 0 : index
    %c0_42 = arith.constant 0 : index
    %c0_43 = arith.constant 0 : index
    %182 = vector.load %arg13[%c0_41, %c0_42, %c0_43] : memref<2x2x32xf32, #tpu.memory_space<vmem>>, vector<1x2x32xf32>
    %183 = vector.shape_cast %182 : vector<1x2x32xf32> to vector<2x32xf32>
    %184 = vector.shape_cast %181 : vector<2x32xf32> to vector<1x2x32xf32>
    tpu.vector_store %arg13[%c0_41, %c0_42, %c0_43], %184 {strides = array<i32>} : memref<2x2x32xf32, #tpu.memory_space<vmem>>, vector<1x2x32xf32>,
    %c0_44 = arith.constant 0 : index
    %c0_45 = arith.constant 0 : index
    %c0_46 = arith.constant 0 : index
    %185 = vector.load %arg14[%c0_44, %c0_45, %c0_46] : memref<2x2x32xf32, #tpu.memory_space<vmem>>, vector<1x2x32xf32>
    %186 = vector.shape_cast %185 : vector<1x2x32xf32> to vector<2x32xf32>
    %187 = vector.shape_cast %179 : vector<2x32xf32> to vector<1x2x32xf32>
    tpu.vector_store %arg14[%c0_44, %c0_45, %c0_46], %187 {strides = array<i32>} : memref<2x2x32xf32, #tpu.memory_space<vmem>>, vector<1x2x32xf32>,
    %c0_47 = arith.constant 0 : index
    %c0_48 = arith.constant 0 : index
    %188 = vector.load %arg5[%c0_47, %c0_48] : memref<64x128xf32, #tpu.memory_space<vmem>>, vector<64x128xf32>
    %c0_49 = arith.constant 0 : index
    %c0_50 = arith.constant 0 : index
    %189 = vector.load %arg6[%c0_49, %c0_50] : memref<1x128xf32, #tpu.memory_space<vmem>>, vector<1x128xf32>
    %c1_51 = arith.constant 1 : index
    %c0_52 = arith.constant 0 : index
    %c0_53 = arith.constant 0 : index
    %190 = vector.load %arg1[%c1_51, %c0_52, %c0_53] : memref<2x2x32xf32, #tpu.memory_space<vmem>>, vector<1x2x32xf32>
    %191 = vector.shape_cast %190 : vector<1x2x32xf32> to vector<2x32xf32>
    %c1_54 = arith.constant 1 : index
    %c0_55 = arith.constant 0 : index
    %c0_56 = arith.constant 0 : index
    %192 = vector.load %arg2[%c1_54, %c0_55, %c0_56] : memref<2x2x32xf32, #tpu.memory_space<vmem>>, vector<1x2x32xf32>
    %193 = vector.shape_cast %192 : vector<1x2x32xf32> to vector<2x32xf32>
    %194 = tpu.concatenate %41, %191 in 1 : vector<2x32xf32>, vector<2x32xf32> -> vector<2x64xf32>
    %cst_57 = arith.constant dense<0.000000e+00> : vector<2x128xf32>
    %195 = tpu.matmul %194, %188, %cst_57 {dimension_numbers = #tpu.dot_dimension_numbers<[1], [0], [0], [1], [0, 0, 1, 1], [], []>} : vector<2x64xf32>, vector<64x128xf32>, vector<2x128xf32> -> vector<2x128xf32>
    %196 = vector.broadcast %189 : vector<1x128xf32> to vector<2x128xf32>
    %197 = arith.addf %195, %196 : vector<2x128xf32>
    %198 = vector.extract_strided_slice %197 {offsets = [0, 0], sizes = [2, 96], strides = [1, 1]} : vector<2x128xf32> to vector<2x96xf32>
    %199 = arith.negf %198 : vector<2x96xf32>
    %200 = math.exp %199 : vector<2x96xf32>
    %cst_58 = arith.constant 1.000000e+00 : f32
    %201 = vector.broadcast %cst_58 : f32 to vector<2x96xf32>
    %202 = arith.addf %201, %200 : vector<2x96xf32>
    %203 = arith.divf %201, %202 : vector<2x96xf32>
    %204 = vector.extract_strided_slice %197 {offsets = [0, 96], sizes = [2, 32], strides = [1, 1]} : vector<2x128xf32> to vector<2x32xf32>
    %205 = math.tanh %204 : vector<2x32xf32>
    %206 = vector.extract_strided_slice %203 {offsets = [0, 0], sizes = [2, 32], strides = [1, 1]} : vector<2x96xf32> to vector<2x32xf32>
    %207 = vector.extract_strided_slice %203 {offsets = [0, 32], sizes = [2, 32], strides = [1, 1]} : vector<2x96xf32> to vector<2x32xf32>
    %208 = vector.extract_strided_slice %203 {offsets = [0, 64], sizes = [2, 32], strides = [1, 1]} : vector<2x96xf32> to vector<2x32xf32>
    %209 = arith.mulf %207, %193 : vector<2x32xf32>
    %210 = arith.mulf %206, %205 : vector<2x32xf32>
    %211 = arith.addf %209, %210 : vector<2x32xf32>
    %212 = math.tanh %211 : vector<2x32xf32>
    %213 = arith.mulf %208, %212 : vector<2x32xf32>
    %214 = tpu.concatenate %61, %213 in 1 : vector<2x32xf32>, vector<2x32xf32> -> vector<2x64xf32>
    %cst_59 = arith.constant dense<0.000000e+00> : vector<2x128xf32>
    %215 = tpu.matmul %214, %188, %cst_59 {dimension_numbers = #tpu.dot_dimension_numbers<[1], [0], [0], [1], [0, 0, 1, 1], [], []>} : vector<2x64xf32>, vector<64x128xf32>, vector<2x128xf32> -> vector<2x128xf32>
    %216 = vector.broadcast %189 : vector<1x128xf32> to vector<2x128xf32>
    %217 = arith.addf %215, %216 : vector<2x128xf32>
    %218 = vector.extract_strided_slice %217 {offsets = [0, 0], sizes = [2, 96], strides = [1, 1]} : vector<2x128xf32> to vector<2x96xf32>
    %219 = arith.negf %218 : vector<2x96xf32>
    %220 = math.exp %219 : vector<2x96xf32>
    %cst_60 = arith.constant 1.000000e+00 : f32
    %221 = vector.broadcast %cst_60 : f32 to vector<2x96xf32>
    %222 = arith.addf %221, %220 : vector<2x96xf32>
    %223 = arith.divf %221, %222 : vector<2x96xf32>
    %224 = vector.extract_strided_slice %217 {offsets = [0, 96], sizes = [2, 32], strides = [1, 1]} : vector<2x128xf32> to vector<2x32xf32>
    %225 = math.tanh %224 : vector<2x32xf32>
    %226 = vector.extract_strided_slice %223 {offsets = [0, 0], sizes = [2, 32], strides = [1, 1]} : vector<2x96xf32> to vector<2x32xf32>
    %227 = vector.extract_strided_slice %223 {offsets = [0, 32], sizes = [2, 32], strides = [1, 1]} : vector<2x96xf32> to vector<2x32xf32>
    %228 = vector.extract_strided_slice %223 {offsets = [0, 64], sizes = [2, 32], strides = [1, 1]} : vector<2x96xf32> to vector<2x32xf32>
    %229 = arith.mulf %227, %211 : vector<2x32xf32>
    %230 = arith.mulf %226, %225 : vector<2x32xf32>
    %231 = arith.addf %229, %230 : vector<2x32xf32>
    %232 = math.tanh %231 : vector<2x32xf32>
    %233 = arith.mulf %228, %232 : vector<2x32xf32>
    %234 = tpu.concatenate %81, %233 in 1 : vector<2x32xf32>, vector<2x32xf32> -> vector<2x64xf32>
    %cst_61 = arith.constant dense<0.000000e+00> : vector<2x128xf32>
    %235 = tpu.matmul %234, %188, %cst_61 {dimension_numbers = #tpu.dot_dimension_numbers<[1], [0], [0], [1], [0, 0, 1, 1], [], []>} : vector<2x64xf32>, vector<64x128xf32>, vector<2x128xf32> -> vector<2x128xf32>
    %236 = vector.broadcast %189 : vector<1x128xf32> to vector<2x128xf32>
    %237 = arith.addf %235, %236 : vector<2x128xf32>
    %238 = vector.extract_strided_slice %237 {offsets = [0, 0], sizes = [2, 96], strides = [1, 1]} : vector<2x128xf32> to vector<2x96xf32>
    %239 = arith.negf %238 : vector<2x96xf32>
    %240 = math.exp %239 : vector<2x96xf32>
    %cst_62 = arith.constant 1.000000e+00 : f32
    %241 = vector.broadcast %cst_62 : f32 to vector<2x96xf32>
    %242 = arith.addf %241, %240 : vector<2x96xf32>
    %243 = arith.divf %241, %242 : vector<2x96xf32>
    %244 = vector.extract_strided_slice %237 {offsets = [0, 96], sizes = [2, 32], strides = [1, 1]} : vector<2x128xf32> to vector<2x32xf32>
    %245 = math.tanh %244 : vector<2x32xf32>
    %246 = vector.extract_strided_slice %243 {offsets = [0, 0], sizes = [2, 32], strides = [1, 1]} : vector<2x96xf32> to vector<2x32xf32>
    %247 = vector.extract_strided_slice %243 {offsets = [0, 32], sizes = [2, 32], strides = [1, 1]} : vector<2x96xf32> to vector<2x32xf32>
    %248 = vector.extract_strided_slice %243 {offsets = [0, 64], sizes = [2, 32], strides = [1, 1]} : vector<2x96xf32> to vector<2x32xf32>
    %249 = arith.mulf %247, %231 : vector<2x32xf32>
    %250 = arith.mulf %246, %245 : vector<2x32xf32>
    %251 = arith.addf %249, %250 : vector<2x32xf32>
    %252 = math.tanh %251 : vector<2x32xf32>
    %253 = arith.mulf %248, %252 : vector<2x32xf32>
    %254 = tpu.concatenate %101, %253 in 1 : vector<2x32xf32>, vector<2x32xf32> -> vector<2x64xf32>
    %cst_63 = arith.constant dense<0.000000e+00> : vector<2x128xf32>
    %255 = tpu.matmul %254, %188, %cst_63 {dimension_numbers = #tpu.dot_dimension_numbers<[1], [0], [0], [1], [0, 0, 1, 1], [], []>} : vector<2x64xf32>, vector<64x128xf32>, vector<2x128xf32> -> vector<2x128xf32>
    %256 = vector.broadcast %189 : vector<1x128xf32> to vector<2x128xf32>
    %257 = arith.addf %255, %256 : vector<2x128xf32>
    %258 = vector.extract_strided_slice %257 {offsets = [0, 0], sizes = [2, 96], strides = [1, 1]} : vector<2x128xf32> to vector<2x96xf32>
    %259 = arith.negf %258 : vector<2x96xf32>
    %260 = math.exp %259 : vector<2x96xf32>
    %cst_64 = arith.constant 1.000000e+00 : f32
    %261 = vector.broadcast %cst_64 : f32 to vector<2x96xf32>
    %262 = arith.addf %261, %260 : vector<2x96xf32>
    %263 = arith.divf %261, %262 : vector<2x96xf32>
    %264 = vector.extract_strided_slice %257 {offsets = [0, 96], sizes = [2, 32], strides = [1, 1]} : vector<2x128xf32> to vector<2x32xf32>
    %265 = math.tanh %264 : vector<2x32xf32>
    %266 = vector.extract_strided_slice %263 {offsets = [0, 0], sizes = [2, 32], strides = [1, 1]} : vector<2x96xf32> to vector<2x32xf32>
    %267 = vector.extract_strided_slice %263 {offsets = [0, 32], sizes = [2, 32], strides = [1, 1]} : vector<2x96xf32> to vector<2x32xf32>
    %268 = vector.extract_strided_slice %263 {offsets = [0, 64], sizes = [2, 32], strides = [1, 1]} : vector<2x96xf32> to vector<2x32xf32>
    %269 = arith.mulf %267, %251 : vector<2x32xf32>
    %270 = arith.mulf %266, %265 : vector<2x32xf32>
    %271 = arith.addf %269, %270 : vector<2x32xf32>
    %272 = math.tanh %271 : vector<2x32xf32>
    %273 = arith.mulf %268, %272 : vector<2x32xf32>
    %274 = tpu.concatenate %121, %273 in 1 : vector<2x32xf32>, vector<2x32xf32> -> vector<2x64xf32>
    %cst_65 = arith.constant dense<0.000000e+00> : vector<2x128xf32>
    %275 = tpu.matmul %274, %188, %cst_65 {dimension_numbers = #tpu.dot_dimension_numbers<[1], [0], [0], [1], [0, 0, 1, 1], [], []>} : vector<2x64xf32>, vector<64x128xf32>, vector<2x128xf32> -> vector<2x128xf32>
    %276 = vector.broadcast %189 : vector<1x128xf32> to vector<2x128xf32>
    %277 = arith.addf %275, %276 : vector<2x128xf32>
    %278 = vector.extract_strided_slice %277 {offsets = [0, 0], sizes = [2, 96], strides = [1, 1]} : vector<2x128xf32> to vector<2x96xf32>
    %279 = arith.negf %278 : vector<2x96xf32>
    %280 = math.exp %279 : vector<2x96xf32>
    %cst_66 = arith.constant 1.000000e+00 : f32
    %281 = vector.broadcast %cst_66 : f32 to vector<2x96xf32>
    %282 = arith.addf %281, %280 : vector<2x96xf32>
    %283 = arith.divf %281, %282 : vector<2x96xf32>
    %284 = vector.extract_strided_slice %277 {offsets = [0, 96], sizes = [2, 32], strides = [1, 1]} : vector<2x128xf32> to vector<2x32xf32>
    %285 = math.tanh %284 : vector<2x32xf32>
    %286 = vector.extract_strided_slice %283 {offsets = [0, 0], sizes = [2, 32], strides = [1, 1]} : vector<2x96xf32> to vector<2x32xf32>
    %287 = vector.extract_strided_slice %283 {offsets = [0, 32], sizes = [2, 32], strides = [1, 1]} : vector<2x96xf32> to vector<2x32xf32>
    %288 = vector.extract_strided_slice %283 {offsets = [0, 64], sizes = [2, 32], strides = [1, 1]} : vector<2x96xf32> to vector<2x32xf32>
    %289 = arith.mulf %287, %271 : vector<2x32xf32>
    %290 = arith.mulf %286, %285 : vector<2x32xf32>
    %291 = arith.addf %289, %290 : vector<2x32xf32>
    %292 = math.tanh %291 : vector<2x32xf32>
    %293 = arith.mulf %288, %292 : vector<2x32xf32>
    %294 = tpu.concatenate %141, %293 in 1 : vector<2x32xf32>, vector<2x32xf32> -> vector<2x64xf32>
    %cst_67 = arith.constant dense<0.000000e+00> : vector<2x128xf32>
    %295 = tpu.matmul %294, %188, %cst_67 {dimension_numbers = #tpu.dot_dimension_numbers<[1], [0], [0], [1], [0, 0, 1, 1], [], []>} : vector<2x64xf32>, vector<64x128xf32>, vector<2x128xf32> -> vector<2x128xf32>
    %296 = vector.broadcast %189 : vector<1x128xf32> to vector<2x128xf32>
    %297 = arith.addf %295, %296 : vector<2x128xf32>
    %298 = vector.extract_strided_slice %297 {offsets = [0, 0], sizes = [2, 96], strides = [1, 1]} : vector<2x128xf32> to vector<2x96xf32>
    %299 = arith.negf %298 : vector<2x96xf32>
    %300 = math.exp %299 : vector<2x96xf32>
    %cst_68 = arith.constant 1.000000e+00 : f32
    %301 = vector.broadcast %cst_68 : f32 to vector<2x96xf32>
    %302 = arith.addf %301, %300 : vector<2x96xf32>
    %303 = arith.divf %301, %302 : vector<2x96xf32>
    %304 = vector.extract_strided_slice %297 {offsets = [0, 96], sizes = [2, 32], strides = [1, 1]} : vector<2x128xf32> to vector<2x32xf32>
    %305 = math.tanh %304 : vector<2x32xf32>
    %306 = vector.extract_strided_slice %303 {offsets = [0, 0], sizes = [2, 32], strides = [1, 1]} : vector<2x96xf32> to vector<2x32xf32>
    %307 = vector.extract_strided_slice %303 {offsets = [0, 32], sizes = [2, 32], strides = [1, 1]} : vector<2x96xf32> to vector<2x32xf32>
    %308 = vector.extract_strided_slice %303 {offsets = [0, 64], sizes = [2, 32], strides = [1, 1]} : vector<2x96xf32> to vector<2x32xf32>
    %309 = arith.mulf %307, %291 : vector<2x32xf32>
    %310 = arith.mulf %306, %305 : vector<2x32xf32>
    %311 = arith.addf %309, %310 : vector<2x32xf32>
    %312 = math.tanh %311 : vector<2x32xf32>
    %313 = arith.mulf %308, %312 : vector<2x32xf32>
    %314 = tpu.concatenate %161, %313 in 1 : vector<2x32xf32>, vector<2x32xf32> -> vector<2x64xf32>
    %cst_69 = arith.constant dense<0.000000e+00> : vector<2x128xf32>
    %315 = tpu.matmul %314, %188, %cst_69 {dimension_numbers = #tpu.dot_dimension_numbers<[1], [0], [0], [1], [0, 0, 1, 1], [], []>} : vector<2x64xf32>, vector<64x128xf32>, vector<2x128xf32> -> vector<2x128xf32>
    %316 = vector.broadcast %189 : vector<1x128xf32> to vector<2x128xf32>
    %317 = arith.addf %315, %316 : vector<2x128xf32>
    %318 = vector.extract_strided_slice %317 {offsets = [0, 0], sizes = [2, 96], strides = [1, 1]} : vector<2x128xf32> to vector<2x96xf32>
    %319 = arith.negf %318 : vector<2x96xf32>
    %320 = math.exp %319 : vector<2x96xf32>
    %cst_70 = arith.constant 1.000000e+00 : f32
    %321 = vector.broadcast %cst_70 : f32 to vector<2x96xf32>
    %322 = arith.addf %321, %320 : vector<2x96xf32>
    %323 = arith.divf %321, %322 : vector<2x96xf32>
    %324 = vector.extract_strided_slice %317 {offsets = [0, 96], sizes = [2, 32], strides = [1, 1]} : vector<2x128xf32> to vector<2x32xf32>
    %325 = math.tanh %324 : vector<2x32xf32>
    %326 = vector.extract_strided_slice %323 {offsets = [0, 0], sizes = [2, 32], strides = [1, 1]} : vector<2x96xf32> to vector<2x32xf32>
    %327 = vector.extract_strided_slice %323 {offsets = [0, 32], sizes = [2, 32], strides = [1, 1]} : vector<2x96xf32> to vector<2x32xf32>
    %328 = vector.extract_strided_slice %323 {offsets = [0, 64], sizes = [2, 32], strides = [1, 1]} : vector<2x96xf32> to vector<2x32xf32>
    %329 = arith.mulf %327, %311 : vector<2x32xf32>
    %330 = arith.mulf %326, %325 : vector<2x32xf32>
    %331 = arith.addf %329, %330 : vector<2x32xf32>
    %332 = math.tanh %331 : vector<2x32xf32>
    %333 = arith.mulf %328, %332 : vector<2x32xf32>
    %334 = tpu.concatenate %181, %333 in 1 : vector<2x32xf32>, vector<2x32xf32> -> vector<2x64xf32>
    %cst_71 = arith.constant dense<0.000000e+00> : vector<2x128xf32>
    %335 = tpu.matmul %334, %188, %cst_71 {dimension_numbers = #tpu.dot_dimension_numbers<[1], [0], [0], [1], [0, 0, 1, 1], [], []>} : vector<2x64xf32>, vector<64x128xf32>, vector<2x128xf32> -> vector<2x128xf32>
    %336 = vector.broadcast %189 : vector<1x128xf32> to vector<2x128xf32>
    %337 = arith.addf %335, %336 : vector<2x128xf32>
    %338 = vector.extract_strided_slice %337 {offsets = [0, 0], sizes = [2, 96], strides = [1, 1]} : vector<2x128xf32> to vector<2x96xf32>
    %339 = arith.negf %338 : vector<2x96xf32>
    %340 = math.exp %339 : vector<2x96xf32>
    %cst_72 = arith.constant 1.000000e+00 : f32
    %341 = vector.broadcast %cst_72 : f32 to vector<2x96xf32>
    %342 = arith.addf %341, %340 : vector<2x96xf32>
    %343 = arith.divf %341, %342 : vector<2x96xf32>
    %344 = vector.extract_strided_slice %337 {offsets = [0, 96], sizes = [2, 32], strides = [1, 1]} : vector<2x128xf32> to vector<2x32xf32>
    %345 = math.tanh %344 : vector<2x32xf32>
    %346 = vector.extract_strided_slice %343 {offsets = [0, 0], sizes = [2, 32], strides = [1, 1]} : vector<2x96xf32> to vector<2x32xf32>
    %347 = vector.extract_strided_slice %343 {offsets = [0, 32], sizes = [2, 32], strides = [1, 1]} : vector<2x96xf32> to vector<2x32xf32>
    %348 = vector.extract_strided_slice %343 {offsets = [0, 64], sizes = [2, 32], strides = [1, 1]} : vector<2x96xf32> to vector<2x32xf32>
    %349 = arith.mulf %347, %331 : vector<2x32xf32>
    %350 = arith.mulf %346, %345 : vector<2x32xf32>
    %351 = arith.addf %349, %350 : vector<2x32xf32>
    %352 = math.tanh %351 : vector<2x32xf32>
    %353 = arith.mulf %348, %352 : vector<2x32xf32>
    %c1_73 = arith.constant 1 : index
    %c0_74 = arith.constant 0 : index
    %c0_75 = arith.constant 0 : index
    %354 = vector.load %arg13[%c1_73, %c0_74, %c0_75] : memref<2x2x32xf32, #tpu.memory_space<vmem>>, vector<1x2x32xf32>
    %355 = vector.shape_cast %354 : vector<1x2x32xf32> to vector<2x32xf32>
    %356 = vector.shape_cast %353 : vector<2x32xf32> to vector<1x2x32xf32>
    tpu.vector_store %arg13[%c1_73, %c0_74, %c0_75], %356 {strides = array<i32>} : memref<2x2x32xf32, #tpu.memory_space<vmem>>, vector<1x2x32xf32>,
    %c1_76 = arith.constant 1 : index
    %c0_77 = arith.constant 0 : index
    %c0_78 = arith.constant 0 : index
    %357 = vector.load %arg14[%c1_76, %c0_77, %c0_78] : memref<2x2x32xf32, #tpu.memory_space<vmem>>, vector<1x2x32xf32>
    %358 = vector.shape_cast %357 : vector<1x2x32xf32> to vector<2x32xf32>
    %359 = vector.shape_cast %351 : vector<2x32xf32> to vector<1x2x32xf32>
    tpu.vector_store %arg14[%c1_76, %c0_77, %c0_78], %359 {strides = array<i32>} : memref<2x2x32xf32, #tpu.memory_space<vmem>>, vector<1x2x32xf32>,
    %c0_79 = arith.constant 0 : index
    %c0_80 = arith.constant 0 : index
    %360 = vector.load %arg7[%c0_79, %c0_80] : memref<32x16xf32, #tpu.memory_space<vmem>>, vector<32x16xf32>
    %c0_81 = arith.constant 0 : index
    %c0_82 = arith.constant 0 : index
    %361 = vector.load %arg8[%c0_81, %c0_82] : memref<1x16xf32, #tpu.memory_space<vmem>>, vector<1x16xf32>
    %c0_83 = arith.constant 0 : index
    %c0_84 = arith.constant 0 : index
    %362 = vector.load %arg9[%c0_83, %c0_84] : memref<32x8xf32, #tpu.memory_space<vmem>>, vector<32x8xf32>
    %c0_85 = arith.constant 0 : index
    %c0_86 = arith.constant 0 : index
    %363 = vector.load %arg10[%c0_85, %c0_86] : memref<1x8xf32, #tpu.memory_space<vmem>>, vector<1x8xf32>
    %cst_87 = arith.constant dense<0.000000e+00> : vector<2x16xf32>
    %364 = tpu.matmul %213, %360, %cst_87 {dimension_numbers = #tpu.dot_dimension_numbers<[1], [0], [0], [1], [0, 0, 1, 1], [], []>} : vector<2x32xf32>, vector<32x16xf32>, vector<2x16xf32> -> vector<2x16xf32>
    %365 = vector.broadcast %361 : vector<1x16xf32> to vector<2x16xf32>
    %366 = arith.addf %364, %365 : vector<2x16xf32>
    %c0_88 = arith.constant 0 : index
    %c0_89 = arith.constant 0 : index
    %c0_90 = arith.constant 0 : index
    %367 = vector.load %arg11[%c0_88, %c0_89, %c0_90] : memref<2x8x16xf32, #tpu.memory_space<vmem>>, vector<2x1x16xf32>
    %368 = vector.shape_cast %367 : vector<2x1x16xf32> to vector<2x16xf32>
    %369 = vector.shape_cast %366 : vector<2x16xf32> to vector<2x1x16xf32>
    tpu.vector_store %arg11[%c0_88, %c0_89, %c0_90], %369 {strides = array<i32>} : memref<2x8x16xf32, #tpu.memory_space<vmem>>, vector<2x1x16xf32>,
    %c0_91 = arith.constant 0 : index
    %c0_92 = arith.constant 0 : index
    %c0_93 = arith.constant 0 : index
    %370 = vector.load %arg0[%c0_91, %c0_92, %c0_93] : memref<2x8x32xf32, #tpu.memory_space<vmem>>, vector<2x1x32xf32>
    %371 = vector.shape_cast %370 : vector<2x1x32xf32> to vector<2x32xf32>
    %cst_94 = arith.constant dense<0.000000e+00> : vector<2x8xf32>
    %372 = tpu.matmul %371, %362, %cst_94 {dimension_numbers = #tpu.dot_dimension_numbers<[1], [0], [0], [1], [0, 0, 1, 1], [], []>} : vector<2x32xf32>, vector<32x8xf32>, vector<2x8xf32> -> vector<2x8xf32>
    %373 = vector.broadcast %363 : vector<1x8xf32> to vector<2x8xf32>
    %374 = arith.addf %372, %373 : vector<2x8xf32>
    %c0_95 = arith.constant 0 : index
    %c0_96 = arith.constant 0 : index
    %c0_97 = arith.constant 0 : index
    %375 = vector.load %arg12[%c0_95, %c0_96, %c0_97] : memref<2x8x8xf32, #tpu.memory_space<vmem>>, vector<2x1x8xf32>
    %376 = vector.shape_cast %375 : vector<2x1x8xf32> to vector<2x8xf32>
    %377 = vector.shape_cast %374 : vector<2x8xf32> to vector<2x1x8xf32>
    tpu.vector_store %arg12[%c0_95, %c0_96, %c0_97], %377 {strides = array<i32>} : memref<2x8x8xf32, #tpu.memory_space<vmem>>, vector<2x1x8xf32>,
    %cst_98 = arith.constant dense<0.000000e+00> : vector<2x16xf32>
    %378 = tpu.matmul %233, %360, %cst_98 {dimension_numbers = #tpu.dot_dimension_numbers<[1], [0], [0], [1], [0, 0, 1, 1], [], []>} : vector<2x32xf32>, vector<32x16xf32>, vector<2x16xf32> -> vector<2x16xf32>
    %379 = vector.broadcast %361 : vector<1x16xf32> to vector<2x16xf32>
    %380 = arith.addf %378, %379 : vector<2x16xf32>
    %c0_99 = arith.constant 0 : index
    %c1_100 = arith.constant 1 : index
    %c0_101 = arith.constant 0 : index
    %381 = vector.load %arg11[%c0_99, %c1_100, %c0_101] : memref<2x8x16xf32, #tpu.memory_space<vmem>>, vector<2x1x16xf32>
    %382 = vector.shape_cast %381 : vector<2x1x16xf32> to vector<2x16xf32>
    %383 = vector.shape_cast %380 : vector<2x16xf32> to vector<2x1x16xf32>
    tpu.vector_store %arg11[%c0_99, %c1_100, %c0_101], %383 {strides = array<i32>} : memref<2x8x16xf32, #tpu.memory_space<vmem>>, vector<2x1x16xf32>,
    %c0_102 = arith.constant 0 : index
    %c1_103 = arith.constant 1 : index
    %c0_104 = arith.constant 0 : index
    %384 = vector.load %arg0[%c0_102, %c1_103, %c0_104] : memref<2x8x32xf32, #tpu.memory_space<vmem>>, vector<2x1x32xf32>
    %385 = vector.shape_cast %384 : vector<2x1x32xf32> to vector<2x32xf32>
    %cst_105 = arith.constant dense<0.000000e+00> : vector<2x8xf32>
    %386 = tpu.matmul %385, %362, %cst_105 {dimension_numbers = #tpu.dot_dimension_numbers<[1], [0], [0], [1], [0, 0, 1, 1], [], []>} : vector<2x32xf32>, vector<32x8xf32>, vector<2x8xf32> -> vector<2x8xf32>
    %387 = vector.broadcast %363 : vector<1x8xf32> to vector<2x8xf32>
    %388 = arith.addf %386, %387 : vector<2x8xf32>
    %c0_106 = arith.constant 0 : index
    %c1_107 = arith.constant 1 : index
    %c0_108 = arith.constant 0 : index
    %389 = vector.load %arg12[%c0_106, %c1_107, %c0_108] : memref<2x8x8xf32, #tpu.memory_space<vmem>>, vector<2x1x8xf32>
    %390 = vector.shape_cast %389 : vector<2x1x8xf32> to vector<2x8xf32>
    %391 = vector.shape_cast %388 : vector<2x8xf32> to vector<2x1x8xf32>
    tpu.vector_store %arg12[%c0_106, %c1_107, %c0_108], %391 {strides = array<i32>} : memref<2x8x8xf32, #tpu.memory_space<vmem>>, vector<2x1x8xf32>,
    %cst_109 = arith.constant dense<0.000000e+00> : vector<2x16xf32>
    %392 = tpu.matmul %253, %360, %cst_109 {dimension_numbers = #tpu.dot_dimension_numbers<[1], [0], [0], [1], [0, 0, 1, 1], [], []>} : vector<2x32xf32>, vector<32x16xf32>, vector<2x16xf32> -> vector<2x16xf32>
    %393 = vector.broadcast %361 : vector<1x16xf32> to vector<2x16xf32>
    %394 = arith.addf %392, %393 : vector<2x16xf32>
    %c0_110 = arith.constant 0 : index
    %c2_111 = arith.constant 2 : index
    %c0_112 = arith.constant 0 : index
    %395 = vector.load %arg11[%c0_110, %c2_111, %c0_112] : memref<2x8x16xf32, #tpu.memory_space<vmem>>, vector<2x1x16xf32>
    %396 = vector.shape_cast %395 : vector<2x1x16xf32> to vector<2x16xf32>
    %397 = vector.shape_cast %394 : vector<2x16xf32> to vector<2x1x16xf32>
    tpu.vector_store %arg11[%c0_110, %c2_111, %c0_112], %397 {strides = array<i32>} : memref<2x8x16xf32, #tpu.memory_space<vmem>>, vector<2x1x16xf32>,
    %c0_113 = arith.constant 0 : index
    %c2_114 = arith.constant 2 : index
    %c0_115 = arith.constant 0 : index
    %398 = vector.load %arg0[%c0_113, %c2_114, %c0_115] : memref<2x8x32xf32, #tpu.memory_space<vmem>>, vector<2x1x32xf32>
    %399 = vector.shape_cast %398 : vector<2x1x32xf32> to vector<2x32xf32>
    %cst_116 = arith.constant dense<0.000000e+00> : vector<2x8xf32>
    %400 = tpu.matmul %399, %362, %cst_116 {dimension_numbers = #tpu.dot_dimension_numbers<[1], [0], [0], [1], [0, 0, 1, 1], [], []>} : vector<2x32xf32>, vector<32x8xf32>, vector<2x8xf32> -> vector<2x8xf32>
    %401 = vector.broadcast %363 : vector<1x8xf32> to vector<2x8xf32>
    %402 = arith.addf %400, %401 : vector<2x8xf32>
    %c0_117 = arith.constant 0 : index
    %c2_118 = arith.constant 2 : index
    %c0_119 = arith.constant 0 : index
    %403 = vector.load %arg12[%c0_117, %c2_118, %c0_119] : memref<2x8x8xf32, #tpu.memory_space<vmem>>, vector<2x1x8xf32>
    %404 = vector.shape_cast %403 : vector<2x1x8xf32> to vector<2x8xf32>
    %405 = vector.shape_cast %402 : vector<2x8xf32> to vector<2x1x8xf32>
    tpu.vector_store %arg12[%c0_117, %c2_118, %c0_119], %405 {strides = array<i32>} : memref<2x8x8xf32, #tpu.memory_space<vmem>>, vector<2x1x8xf32>,
    %cst_120 = arith.constant dense<0.000000e+00> : vector<2x16xf32>
    %406 = tpu.matmul %273, %360, %cst_120 {dimension_numbers = #tpu.dot_dimension_numbers<[1], [0], [0], [1], [0, 0, 1, 1], [], []>} : vector<2x32xf32>, vector<32x16xf32>, vector<2x16xf32> -> vector<2x16xf32>
    %407 = vector.broadcast %361 : vector<1x16xf32> to vector<2x16xf32>
    %408 = arith.addf %406, %407 : vector<2x16xf32>
    %c0_121 = arith.constant 0 : index
    %c3_122 = arith.constant 3 : index
    %c0_123 = arith.constant 0 : index
    %409 = vector.load %arg11[%c0_121, %c3_122, %c0_123] : memref<2x8x16xf32, #tpu.memory_space<vmem>>, vector<2x1x16xf32>
    %410 = vector.shape_cast %409 : vector<2x1x16xf32> to vector<2x16xf32>
    %411 = vector.shape_cast %408 : vector<2x16xf32> to vector<2x1x16xf32>
    tpu.vector_store %arg11[%c0_121, %c3_122, %c0_123], %411 {strides = array<i32>} : memref<2x8x16xf32, #tpu.memory_space<vmem>>, vector<2x1x16xf32>,
    %c0_124 = arith.constant 0 : index
    %c3_125 = arith.constant 3 : index
    %c0_126 = arith.constant 0 : index
    %412 = vector.load %arg0[%c0_124, %c3_125, %c0_126] : memref<2x8x32xf32, #tpu.memory_space<vmem>>, vector<2x1x32xf32>
    %413 = vector.shape_cast %412 : vector<2x1x32xf32> to vector<2x32xf32>
    %cst_127 = arith.constant dense<0.000000e+00> : vector<2x8xf32>
    %414 = tpu.matmul %413, %362, %cst_127 {dimension_numbers = #tpu.dot_dimension_numbers<[1], [0], [0], [1], [0, 0, 1, 1], [], []>} : vector<2x32xf32>, vector<32x8xf32>, vector<2x8xf32> -> vector<2x8xf32>
    %415 = vector.broadcast %363 : vector<1x8xf32> to vector<2x8xf32>
    %416 = arith.addf %414, %415 : vector<2x8xf32>
    %c0_128 = arith.constant 0 : index
    %c3_129 = arith.constant 3 : index
    %c0_130 = arith.constant 0 : index
    %417 = vector.load %arg12[%c0_128, %c3_129, %c0_130] : memref<2x8x8xf32, #tpu.memory_space<vmem>>, vector<2x1x8xf32>
    %418 = vector.shape_cast %417 : vector<2x1x8xf32> to vector<2x8xf32>
    %419 = vector.shape_cast %416 : vector<2x8xf32> to vector<2x1x8xf32>
    tpu.vector_store %arg12[%c0_128, %c3_129, %c0_130], %419 {strides = array<i32>} : memref<2x8x8xf32, #tpu.memory_space<vmem>>, vector<2x1x8xf32>,
    %cst_131 = arith.constant dense<0.000000e+00> : vector<2x16xf32>
    %420 = tpu.matmul %293, %360, %cst_131 {dimension_numbers = #tpu.dot_dimension_numbers<[1], [0], [0], [1], [0, 0, 1, 1], [], []>} : vector<2x32xf32>, vector<32x16xf32>, vector<2x16xf32> -> vector<2x16xf32>
    %421 = vector.broadcast %361 : vector<1x16xf32> to vector<2x16xf32>
    %422 = arith.addf %420, %421 : vector<2x16xf32>
    %c0_132 = arith.constant 0 : index
    %c4_133 = arith.constant 4 : index
    %c0_134 = arith.constant 0 : index
    %423 = vector.load %arg11[%c0_132, %c4_133, %c0_134] : memref<2x8x16xf32, #tpu.memory_space<vmem>>, vector<2x1x16xf32>
    %424 = vector.shape_cast %423 : vector<2x1x16xf32> to vector<2x16xf32>
    %425 = vector.shape_cast %422 : vector<2x16xf32> to vector<2x1x16xf32>
    tpu.vector_store %arg11[%c0_132, %c4_133, %c0_134], %425 {strides = array<i32>} : memref<2x8x16xf32, #tpu.memory_space<vmem>>, vector<2x1x16xf32>,
    %c0_135 = arith.constant 0 : index
    %c4_136 = arith.constant 4 : index
    %c0_137 = arith.constant 0 : index
    %426 = vector.load %arg0[%c0_135, %c4_136, %c0_137] : memref<2x8x32xf32, #tpu.memory_space<vmem>>, vector<2x1x32xf32>
    %427 = vector.shape_cast %426 : vector<2x1x32xf32> to vector<2x32xf32>
    %cst_138 = arith.constant dense<0.000000e+00> : vector<2x8xf32>
    %428 = tpu.matmul %427, %362, %cst_138 {dimension_numbers = #tpu.dot_dimension_numbers<[1], [0], [0], [1], [0, 0, 1, 1], [], []>} : vector<2x32xf32>, vector<32x8xf32>, vector<2x8xf32> -> vector<2x8xf32>
    %429 = vector.broadcast %363 : vector<1x8xf32> to vector<2x8xf32>
    %430 = arith.addf %428, %429 : vector<2x8xf32>
    %c0_139 = arith.constant 0 : index
    %c4_140 = arith.constant 4 : index
    %c0_141 = arith.constant 0 : index
    %431 = vector.load %arg12[%c0_139, %c4_140, %c0_141] : memref<2x8x8xf32, #tpu.memory_space<vmem>>, vector<2x1x8xf32>
    %432 = vector.shape_cast %431 : vector<2x1x8xf32> to vector<2x8xf32>
    %433 = vector.shape_cast %430 : vector<2x8xf32> to vector<2x1x8xf32>
    tpu.vector_store %arg12[%c0_139, %c4_140, %c0_141], %433 {strides = array<i32>} : memref<2x8x8xf32, #tpu.memory_space<vmem>>, vector<2x1x8xf32>,
    %cst_142 = arith.constant dense<0.000000e+00> : vector<2x16xf32>
    %434 = tpu.matmul %313, %360, %cst_142 {dimension_numbers = #tpu.dot_dimension_numbers<[1], [0], [0], [1], [0, 0, 1, 1], [], []>} : vector<2x32xf32>, vector<32x16xf32>, vector<2x16xf32> -> vector<2x16xf32>
    %435 = vector.broadcast %361 : vector<1x16xf32> to vector<2x16xf32>
    %436 = arith.addf %434, %435 : vector<2x16xf32>
    %c0_143 = arith.constant 0 : index
    %c5_144 = arith.constant 5 : index
    %c0_145 = arith.constant 0 : index
    %437 = vector.load %arg11[%c0_143, %c5_144, %c0_145] : memref<2x8x16xf32, #tpu.memory_space<vmem>>, vector<2x1x16xf32>
    %438 = vector.shape_cast %437 : vector<2x1x16xf32> to vector<2x16xf32>
    %439 = vector.shape_cast %436 : vector<2x16xf32> to vector<2x1x16xf32>
    tpu.vector_store %arg11[%c0_143, %c5_144, %c0_145], %439 {strides = array<i32>} : memref<2x8x16xf32, #tpu.memory_space<vmem>>, vector<2x1x16xf32>,
    %c0_146 = arith.constant 0 : index
    %c5_147 = arith.constant 5 : index
    %c0_148 = arith.constant 0 : index
    %440 = vector.load %arg0[%c0_146, %c5_147, %c0_148] : memref<2x8x32xf32, #tpu.memory_space<vmem>>, vector<2x1x32xf32>
    %441 = vector.shape_cast %440 : vector<2x1x32xf32> to vector<2x32xf32>
    %cst_149 = arith.constant dense<0.000000e+00> : vector<2x8xf32>
    %442 = tpu.matmul %441, %362, %cst_149 {dimension_numbers = #tpu.dot_dimension_numbers<[1], [0], [0], [1], [0, 0, 1, 1], [], []>} : vector<2x32xf32>, vector<32x8xf32>, vector<2x8xf32> -> vector<2x8xf32>
    %443 = vector.broadcast %363 : vector<1x8xf32> to vector<2x8xf32>
    %444 = arith.addf %442, %443 : vector<2x8xf32>
    %c0_150 = arith.constant 0 : index
    %c5_151 = arith.constant 5 : index
    %c0_152 = arith.constant 0 : index
    %445 = vector.load %arg12[%c0_150, %c5_151, %c0_152] : memref<2x8x8xf32, #tpu.memory_space<vmem>>, vector<2x1x8xf32>
    %446 = vector.shape_cast %445 : vector<2x1x8xf32> to vector<2x8xf32>
    %447 = vector.shape_cast %444 : vector<2x8xf32> to vector<2x1x8xf32>
    tpu.vector_store %arg12[%c0_150, %c5_151, %c0_152], %447 {strides = array<i32>} : memref<2x8x8xf32, #tpu.memory_space<vmem>>, vector<2x1x8xf32>,
    %cst_153 = arith.constant dense<0.000000e+00> : vector<2x16xf32>
    %448 = tpu.matmul %333, %360, %cst_153 {dimension_numbers = #tpu.dot_dimension_numbers<[1], [0], [0], [1], [0, 0, 1, 1], [], []>} : vector<2x32xf32>, vector<32x16xf32>, vector<2x16xf32> -> vector<2x16xf32>
    %449 = vector.broadcast %361 : vector<1x16xf32> to vector<2x16xf32>
    %450 = arith.addf %448, %449 : vector<2x16xf32>
    %c0_154 = arith.constant 0 : index
    %c6_155 = arith.constant 6 : index
    %c0_156 = arith.constant 0 : index
    %451 = vector.load %arg11[%c0_154, %c6_155, %c0_156] : memref<2x8x16xf32, #tpu.memory_space<vmem>>, vector<2x1x16xf32>
    %452 = vector.shape_cast %451 : vector<2x1x16xf32> to vector<2x16xf32>
    %453 = vector.shape_cast %450 : vector<2x16xf32> to vector<2x1x16xf32>
    tpu.vector_store %arg11[%c0_154, %c6_155, %c0_156], %453 {strides = array<i32>} : memref<2x8x16xf32, #tpu.memory_space<vmem>>, vector<2x1x16xf32>,
    %c0_157 = arith.constant 0 : index
    %c6_158 = arith.constant 6 : index
    %c0_159 = arith.constant 0 : index
    %454 = vector.load %arg0[%c0_157, %c6_158, %c0_159] : memref<2x8x32xf32, #tpu.memory_space<vmem>>, vector<2x1x32xf32>
    %455 = vector.shape_cast %454 : vector<2x1x32xf32> to vector<2x32xf32>
    %cst_160 = arith.constant dense<0.000000e+00> : vector<2x8xf32>
    %456 = tpu.matmul %455, %362, %cst_160 {dimension_numbers = #tpu.dot_dimension_numbers<[1], [0], [0], [1], [0, 0, 1, 1], [], []>} : vector<2x32xf32>, vector<32x8xf32>, vector<2x8xf32> -> vector<2x8xf32>
    %457 = vector.broadcast %363 : vector<1x8xf32> to vector<2x8xf32>
    %458 = arith.addf %456, %457 : vector<2x8xf32>
    %c0_161 = arith.constant 0 : index
    %c6_162 = arith.constant 6 : index
    %c0_163 = arith.constant 0 : index
    %459 = vector.load %arg12[%c0_161, %c6_162, %c0_163] : memref<2x8x8xf32, #tpu.memory_space<vmem>>, vector<2x1x8xf32>
    %460 = vector.shape_cast %459 : vector<2x1x8xf32> to vector<2x8xf32>
    %461 = vector.shape_cast %458 : vector<2x8xf32> to vector<2x1x8xf32>
    tpu.vector_store %arg12[%c0_161, %c6_162, %c0_163], %461 {strides = array<i32>} : memref<2x8x8xf32, #tpu.memory_space<vmem>>, vector<2x1x8xf32>,
    %cst_164 = arith.constant dense<0.000000e+00> : vector<2x16xf32>
    %462 = tpu.matmul %353, %360, %cst_164 {dimension_numbers = #tpu.dot_dimension_numbers<[1], [0], [0], [1], [0, 0, 1, 1], [], []>} : vector<2x32xf32>, vector<32x16xf32>, vector<2x16xf32> -> vector<2x16xf32>
    %463 = vector.broadcast %361 : vector<1x16xf32> to vector<2x16xf32>
    %464 = arith.addf %462, %463 : vector<2x16xf32>
    %c0_165 = arith.constant 0 : index
    %c7_166 = arith.constant 7 : index
    %c0_167 = arith.constant 0 : index
    %465 = vector.load %arg11[%c0_165, %c7_166, %c0_167] : memref<2x8x16xf32, #tpu.memory_space<vmem>>, vector<2x1x16xf32>
    %466 = vector.shape_cast %465 : vector<2x1x16xf32> to vector<2x16xf32>
    %467 = vector.shape_cast %464 : vector<2x16xf32> to vector<2x1x16xf32>
    tpu.vector_store %arg11[%c0_165, %c7_166, %c0_167], %467 {strides = array<i32>} : memref<2x8x16xf32, #tpu.memory_space<vmem>>, vector<2x1x16xf32>,
    %c0_168 = arith.constant 0 : index
    %c7_169 = arith.constant 7 : index
    %c0_170 = arith.constant 0 : index
    %468 = vector.load %arg0[%c0_168, %c7_169, %c0_170] : memref<2x8x32xf32, #tpu.memory_space<vmem>>, vector<2x1x32xf32>
    %469 = vector.shape_cast %468 : vector<2x1x32xf32> to vector<2x32xf32>
    %cst_171 = arith.constant dense<0.000000e+00> : vector<2x8xf32>
    %470 = tpu.matmul %469, %362, %cst_171 {dimension_numbers = #tpu.dot_dimension_numbers<[1], [0], [0], [1], [0, 0, 1, 1], [], []>} : vector<2x32xf32>, vector<32x8xf32>, vector<2x8xf32> -> vector<2x8xf32>
    %471 = vector.broadcast %363 : vector<1x8xf32> to vector<2x8xf32>
    %472 = arith.addf %470, %471 : vector<2x8xf32>
    %c0_172 = arith.constant 0 : index
    %c7_173 = arith.constant 7 : index
    %c0_174 = arith.constant 0 : index
    %473 = vector.load %arg12[%c0_172, %c7_173, %c0_174] : memref<2x8x8xf32, #tpu.memory_space<vmem>>, vector<2x1x8xf32>
    %474 = vector.shape_cast %473 : vector<2x1x8xf32> to vector<2x8xf32>
    %475 = vector.shape_cast %472 : vector<2x8xf32> to vector<2x1x8xf32>
    tpu.vector_store %arg12[%c0_172, %c7_173, %c0_174], %475 {strides = array<i32>} : memref<2x8x8xf32, #tpu.memory_space<vmem>>, vector<2x1x8xf32>,
    return
  }
}

</mosaic_0001>

<llo_original>
// kernel: model_forward.1
$region0: #{model_forward.1}
  #allocation0 [shape = 'u32[]', space=smem, size = 0x4, offset = 0x4, fixed_abs, tag = 'smem constant byte address 0x4 - core index']
  #allocation1 [shape = 'u32[72,128]{1,0:T(1,128)}', space=vmem, size = 0x9000, scoped, tag = 'internal scratch']
  %s0 = inlined_call_operand.vmem [shape: f32[2,8,32], index: 0, kind: input, shape index: {}]
  %s1 = inlined_call_operand.vmem [shape: f32[2,2,32], index: 1, kind: input, shape index: {}]
  %s2 = inlined_call_operand.vmem [shape: f32[2,2,32], index: 2, kind: input, shape index: {}]
  %s3 = inlined_call_operand.vmem [shape: f32[64,128], index: 3, kind: input, shape index: {}]
  %s4 = inlined_call_operand.vmem [shape: f32[1,128], index: 4, kind: input, shape index: {}]
  %s5 = inlined_call_operand.vmem [shape: f32[64,128], index: 5, kind: input, shape index: {}]
  %s6 = inlined_call_operand.vmem [shape: f32[1,128], index: 6, kind: input, shape index: {}]
  %s7 = inlined_call_operand.vmem [shape: f32[32,16], index: 7, kind: input, shape index: {}]
  %s8 = inlined_call_operand.vmem [shape: f32[1,16], index: 8, kind: input, shape index: {}]
  %s9 = inlined_call_operand.vmem [shape: f32[32,8], index: 9, kind: input, shape index: {}]
  %s10 = inlined_call_operand.vmem [shape: f32[1,8], index: 10, kind: input, shape index: {}]
  %s11 = inlined_call_operand.hbm [shape: f32[2,8,16], index: 11, kind: output, shape index: {0}]
  %s12 = inlined_call_operand.hbm [shape: f32[2,8,8], index: 12, kind: output, shape index: {1}]
  %s13 = inlined_call_operand.hbm [shape: f32[2,2,32], index: 13, kind: output, shape index: {2}]
  %s14 = inlined_call_operand.hbm [shape: f32[2,2,32], index: 14, kind: output, shape index: {3}]
  %15 = xla_tuple %s11, %s12, %s13, %s14
  %s16 = sld [smem:[#allocation0]]
  $region78: #{model_forward.1} parent=0
    _
  %s18 = ssub.s32 1, %s16
  %s19 = scalar_select 0, %s18, %s16
  $region1: #{model_forward.1} parent=0
    #allocation2 [shape = 'u8[8192]{0}', space=vmem, size = 0x2000, scoped, tag = 'output window, operand 0, single buffered']
    #allocation3 [shape = 's32[1]{0}', space=sflag, size = 0x4, scoped, tag = 'scoped memory for model_forward.1']
    #allocation4 [shape = 'u8[8192]{0}', space=vmem, size = 0x2000, scoped, tag = 'output window, operand 1, single buffered']
    #allocation5 [shape = 's32[1]{0}', space=sflag, size = 0x4, scoped, tag = 'scoped memory for model_forward.1']
    #allocation6 [shape = 'u8[2048]{0}', space=vmem, size = 0x800, scoped, tag = 'output window, operand 2, single buffered']
    #allocation7 [shape = 'u8[2048]{0}', space=vmem, size = 0x800, scoped, tag = 'output window, operand 3, single buffered']
    #allocation8 [shape = 's32[1]{0}', space=sflag, size = 0x4, scoped, tag = 'scoped memory for model_forward.1']
    %20 = vsyncpa [#allocation3], 0
    %21 = vsyncpa [#allocation5], 0
    %22 = vsyncpa [#allocation8], 0
    // Predicated region
    $region2: #{model_forward.1} parent=1 // pred_check
      _
    $region3: #{model_forward.1} parent=1 // pred_check_branch
      %24 = sbr.rel (0) target = $region5
    $region4: #{model_forward.1} parent=1 // pred_region
      _
    $region5: #{model_forward.1} parent=1 // pred_fallthru
      _
    // Predicated region
    $region6: #{model_forward.1} parent=1 // pred_check
      _
    $region7: #{model_forward.1} parent=1 // pred_check_branch
      %26 = sbr.rel (0) target = $region9
    $region8: #{model_forward.1} parent=1 // pred_region
      _
    $region9: #{model_forward.1} parent=1 // pred_fallthru
      _
    // Predicated region
    $region10: #{model_forward.1} parent=1 // pred_check
      _
    $region11: #{model_forward.1} parent=1 // pred_check_branch
      %28 = sbr.rel (0) target = $region13
    $region12: #{model_forward.1} parent=1 // pred_region
      _
    $region13: #{model_forward.1} parent=1 // pred_fallthru
      _
    // Predicated region
    $region14: #{model_forward.1} parent=1 // pred_check
      _
    $region15: #{model_forward.1} parent=1 // pred_check_branch
      %30 = sbr.rel (0) target = $region17
    $region16: #{model_forward.1} parent=1 // pred_region
      _
    $region17: #{model_forward.1} parent=1 // pred_fallthru
      _
    // Predicated region
    $region18: #{model_forward.1} parent=1 // pred_check
      _
    $region19: #{model_forward.1} parent=1 // pred_check_branch
      %32 = sbr.rel (0) target = $region21
    $region20: #{model_forward.1} parent=1 // pred_region
      _
    $region21: #{model_forward.1} parent=1 // pred_fallthru
      _
    // Predicated region
    $region22: #{model_forward.1} parent=1 // pred_check
      _
    $region23: #{model_forward.1} parent=1 // pred_check_branch
      %34 = sbr.rel (0) target = $region25
    $region24: #{model_forward.1} parent=1 // pred_region
      _
    $region25: #{model_forward.1} parent=1 // pred_fallthru
      _
    // Predicated region
    $region26: #{model_forward.1} parent=1 // pred_check
      _
    $region27: #{model_forward.1} parent=1 // pred_check_branch
      %36 = sbr.rel (0) target = $region29
    $region28: #{model_forward.1} parent=1 // pred_region
      _
    $region29: #{model_forward.1} parent=1 // pred_fallthru
      _
    // Predicated region
    $region30: #{model_forward.1} parent=1 // pred_check
      _
    $region31: #{model_forward.1} parent=1 // pred_check_branch
      %38 = sbr.rel (0) target = $region33
    $region32: #{model_forward.1} parent=1 // pred_region
      _
    $region33: #{model_forward.1} parent=1 // pred_fallthru
      _
    // Predicated region
    $region34: #{model_forward.1} parent=1 // pred_check
      _
    $region35: #{model_forward.1} parent=1 // pred_check_branch
      %40 = sbr.rel (0) target = $region37
    $region36: #{model_forward.1} parent=1 // pred_region
      _
    $region37: #{model_forward.1} parent=1 // pred_fallthru
      _
    // Predicated region
    $region38: #{model_forward.1} parent=1 // pred_check
      _
    $region39: #{model_forward.1} parent=1 // pred_check_branch
      %42 = sbr.rel (0) target = $region41
    $region40: #{model_forward.1} parent=1 // pred_region
      _
    $region41: #{model_forward.1} parent=1 // pred_fallthru
      _
    // Predicated region
    $region42: #{model_forward.1} parent=1 // pred_check
      _
    $region43: #{model_forward.1} parent=1 // pred_check_branch
      %44 = sbr.rel (0) target = $region45
    $region44: #{model_forward.1} parent=1 // pred_region
      _
    $region45: #{model_forward.1} parent=1 // pred_fallthru
      _
    %v45 = vld [vmem:[%s0] sm:$0x1]
    %v46 = vld [vmem:[%s0 + $0x8] sm:$0x1]
    %v47 = vld [vmem:[%s0 + $0x1] sm:$0x1]
    %v48 = vld [vmem:[%s0 + $0x9] sm:$0x1]
    %v49 = vld [vmem:[%s0 + $0x2] sm:$0x1]
    %v50 = vld [vmem:[%s0 + $0xa] sm:$0x1]
    %v51 = vld [vmem:[%s0 + $0x3] sm:$0x1]
    %v52 = vld [vmem:[%s0 + $0xb] sm:$0x1]
    %v53 = vld [vmem:[%s0 + $0x4] sm:$0x1]
    %v54 = vld [vmem:[%s0 + $0xc] sm:$0x1]
    %v55 = vld [vmem:[%s0 + $0x5] sm:$0x1]
    %v56 = vld [vmem:[%s0 + $0xd] sm:$0x1]
    %v57 = vld [vmem:[%s0 + $0x6] sm:$0x1]
    %v58 = vld [vmem:[%s0 + $0xe] sm:$0x1]
    %v59 = vld [vmem:[%s0 + $0x7] sm:$0x1]
    %v60 = vld [vmem:[%s0 + $0xf] sm:$0x1]
    %v61 = vld [vmem:[%s3] sm:$0xff]
    %v62 = vld [vmem:[%s3 + $0x8] sm:$0xff]
    %v63 = vld [vmem:[%s3 + $0x10] sm:$0xff]
    %v64 = vld [vmem:[%s3 + $0x18] sm:$0xff]
    %v65 = vld [vmem:[%s3 + $0x20] sm:$0xff]
    %v66 = vld [vmem:[%s3 + $0x28] sm:$0xff]
    %v67 = vld [vmem:[%s3 + $0x30] sm:$0xff]
    %v68 = vld [vmem:[%s3 + $0x38] sm:$0xff]
    %v69 = vld [vmem:[%s4] sm:$0x1]
    %v70 = vld [vmem:[%s1] sm:$0x3]
    %v71 = vld [vmem:[%s2] sm:$0x3]
    %v74 = vrot.slane %v46, 7
    %vm75 = vcmask 1041409
    %v76 = vsel %vm75, %v74, %v45
    %79 = vrot.lane.b32.xlu0 %v70, 32
    %v80 = vpop.permute.xlu0 %79
    %vm82 = vcmask 261120
    %v83 = vsel %vm82, %v76, %v80
    %v85 = vperm.slane %v69, 0
    %vm87 = vcmask 523264
    %v89 = vsel %vm87, %v83, 0
    %91 = vmatpush.msra.mxu0 0.0
    %92 = vmatpush.msra.mxu0 0.0
    %93 = vmatpush.msra.mxu0 0.0
    %94 = vmatpush.msra.mxu0 0.0
    %95 = vmatpush.msra.mxu0 0.0
    %96 = vmatpush.msra.mxu0 0.0
    %97 = vmatpush.msra.mxu0 0.0
    %98 = vmatpush.msra.mxu0 0.0
    %99 = vmatpush.msra.mxu0 %v68
    %100 = vmatpush.msra.mxu0 %v67
    %101 = vmatpush.msra.mxu0 %v66
    %102 = vmatpush.msra.mxu0 %v65
    %103 = vmatpush.msra.mxu0 %v64
    %104 = vmatpush.msra.mxu0 %v63
    %105 = vmatpush.msra.mxu0 %v62
    %106 = vmatpush.msra.mxu0 %v61
    %107 = vmatmul.f32.gmra.mxu0 %v89
    %v108 = vpop.f32.mrf.mxu0
    %v109 = vadd.f32 %v85, %v108
    %110 = vdwg.mxu0
    %v111 = vxor.u32 %v109, 2147483648
    %v112 = vmul.f32 %v111, 1.442695
    %v113 = vpow.pop %v112
    %v114 = vadd.f32 %v113, 1.0
    %v115 = vrcp.pop %v114
    %v116 = vmul.f32 %v114, %v115
    %v117 = vsub.f32 1.0, %v116
    %v118 = vmul.f32 %v115, %v117
    %v119 = vadd.f32 %v115, %v118
    %vm120 = vweird.f32 %v114
    %vm121 = vweird.f32 %v115
    %vm122 = vmor %vm120, %vm121
    %v123 = vsel %vm122, %v115, %v119
    %v124 = vand.u32 2147483647, %v114
    %vm125 = vcmp.eq.f32.partialorder %v124, 8.507059e+37
    %v126 = vand.u32 %v114, 2147483648
    %v127 = vor.u32 1.1754944e-38, %v126
    %v128 = vsel %vm125, %v127, %v123
    %v129 = vmul.f32 1.0, %v128
    %v130 = vtanh.pop %v109
    %132 = vrot.lane.b32.xlu0 %v71, 32
    %v133 = vpop.permute.xlu0 %132
    %v135 = vmul.f32 %v129, %v133
    %137 = vrot.lane.b32.xlu0 %v130, 32
    %v138 = vpop.permute.xlu0 %137
    %v140 = vmul.f32 %v129, %v138
    %142 = vrot.lane.b32.xlu0 %v140, 32
    %v143 = vpop.permute.xlu0 %142
    %v145 = vadd.f32 %v135, %v143
    %v146 = vtanh.pop %v145
    %148 = vrot.lane.b32.xlu0 %v146, 32
    %v149 = vpop.permute.xlu0 %148
    %v151 = vmul.f32 %v129, %v149
    %v154 = vrot.slane %v48, 7
    %v155 = vsel %vm75, %v154, %v47
    %158 = vrot.lane.b32.xlu0 %v151, 96
    %v159 = vpop.permute.xlu0 %158
    %v161 = vsel %vm82, %v155, %v159
    %v163 = vsel %vm87, %v161, 0
    %165 = vmatpush.msra.mxu0 0.0
    %166 = vmatpush.msra.mxu0 0.0
    %167 = vmatpush.msra.mxu0 0.0
    %168 = vmatpush.msra.mxu0 0.0
    %169 = vmatpush.msra.mxu0 0.0
    %170 = vmatpush.msra.mxu0 0.0
    %171 = vmatpush.msra.mxu0 0.0
    %172 = vmatpush.msra.mxu0 0.0
    %173 = vmatpush.msra.mxu0 %v68
    %174 = vmatpush.msra.mxu0 %v67
    %175 = vmatpush.msra.mxu0 %v66
    %176 = vmatpush.msra.mxu0 %v65
    %177 = vmatpush.msra.mxu0 %v64
    %178 = vmatpush.msra.mxu0 %v63
    %179 = vmatpush.msra.mxu0 %v62
    %180 = vmatpush.msra.mxu0 %v61
    %181 = vmatmul.f32.gmra.mxu0 %v163
    %v182 = vpop.f32.mrf.mxu0
    %v183 = vadd.f32 %v85, %v182
    %184 = vdwg.mxu0
    %v185 = vxor.u32 %v183, 2147483648
    %v186 = vmul.f32 %v185, 1.442695
    %v187 = vpow.pop %v186
    %v188 = vadd.f32 %v187, 1.0
    %v189 = vrcp.pop %v188
    %v190 = vmul.f32 %v188, %v189
    %v191 = vsub.f32 1.0, %v190
    %v192 = vmul.f32 %v189, %v191
    %v193 = vadd.f32 %v189, %v192
    %vm194 = vweird.f32 %v188
    %vm195 = vweird.f32 %v189
    %vm196 = vmor %vm194, %vm195
    %v197 = vsel %vm196, %v189, %v193
    %v198 = vand.u32 2147483647, %v188
    %vm199 = vcmp.eq.f32.partialorder %v198, 8.507059e+37
    %v200 = vand.u32 %v188, 2147483648
    %v201 = vor.u32 1.1754944e-38, %v200
    %v202 = vsel %vm199, %v201, %v197
    %v203 = vmul.f32 1.0, %v202
    %v204 = vtanh.pop %v183
    %v205 = vmul.f32 %v203, %v145
    %207 = vrot.lane.b32.xlu0 %v204, 32
    %v208 = vpop.permute.xlu0 %207
    %v210 = vmul.f32 %v203, %v208
    %212 = vrot.lane.b32.xlu0 %v210, 32
    %v213 = vpop.permute.xlu0 %212
    %v215 = vadd.f32 %v205, %v213
    %v216 = vtanh.pop %v215
    %218 = vrot.lane.b32.xlu0 %v216, 32
    %v219 = vpop.permute.xlu0 %218
    %v221 = vmul.f32 %v203, %v219
    %v224 = vrot.slane %v50, 7
    %v225 = vsel %vm75, %v224, %v49
    %228 = vrot.lane.b32.xlu0 %v221, 96
    %v229 = vpop.permute.xlu0 %228
    %v231 = vsel %vm82, %v225, %v229
    %v233 = vsel %vm87, %v231, 0
    %235 = vmatpush.msra.mxu0 0.0
    %236 = vmatpush.msra.mxu0 0.0
    %237 = vmatpush.msra.mxu0 0.0
    %238 = vmatpush.msra.mxu0 0.0
    %239 = vmatpush.msra.mxu0 0.0
    %240 = vmatpush.msra.mxu0 0.0
    %241 = vmatpush.msra.mxu0 0.0
    %242 = vmatpush.msra.mxu0 0.0
    %243 = vmatpush.msra.mxu0 %v68
    %244 = vmatpush.msra.mxu0 %v67
    %245 = vmatpush.msra.mxu0 %v66
    %246 = vmatpush.msra.mxu0 %v65
    %247 = vmatpush.msra.mxu0 %v64
    %248 = vmatpush.msra.mxu0 %v63
    %249 = vmatpush.msra.mxu0 %v62
    %250 = vmatpush.msra.mxu0 %v61
    %251 = vmatmul.f32.gmra.mxu0 %v233
    %v252 = vpop.f32.mrf.mxu0
    %v253 = vadd.f32 %v85, %v252
    %254 = vdwg.mxu0
    %v255 = vxor.u32 %v253, 2147483648
    %v256 = vmul.f32 %v255, 1.442695
    %v257 = vpow.pop %v256
    %v258 = vadd.f32 %v257, 1.0
    %v259 = vrcp.pop %v258
    %v260 = vmul.f32 %v258, %v259
    %v261 = vsub.f32 1.0, %v260
    %v262 = vmul.f32 %v259, %v261
    %v263 = vadd.f32 %v259, %v262
    %vm264 = vweird.f32 %v258
    %vm265 = vweird.f32 %v259
    %vm266 = vmor %vm264, %vm265
    %v267 = vsel %vm266, %v259, %v263
    %v268 = vand.u32 2147483647, %v258
    %vm269 = vcmp.eq.f32.partialorder %v268, 8.507059e+37
    %v270 = vand.u32 %v258, 2147483648
    %v271 = vor.u32 1.1754944e-38, %v270
    %v272 = vsel %vm269, %v271, %v267
    %v273 = vmul.f32 1.0, %v272
    %v274 = vtanh.pop %v253
    %v275 = vmul.f32 %v273, %v215
    %277 = vrot.lane.b32.xlu0 %v274, 32
    %v278 = vpop.permute.xlu0 %277
    %v280 = vmul.f32 %v273, %v278
    %282 = vrot.lane.b32.xlu0 %v280, 32
    %v283 = vpop.permute.xlu0 %282
    %v285 = vadd.f32 %v275, %v283
    %v286 = vtanh.pop %v285
    %288 = vrot.lane.b32.xlu0 %v286, 32
    %v289 = vpop.permute.xlu0 %288
    %v291 = vmul.f32 %v273, %v289
    %v294 = vrot.slane %v52, 7
    %v295 = vsel %vm75, %v294, %v51
    %298 = vrot.lane.b32.xlu0 %v291, 96
    %v299 = vpop.permute.xlu0 %298
    %v301 = vsel %vm82, %v295, %v299
    %v303 = vsel %vm87, %v301, 0
    %305 = vmatpush.msra.mxu0 0.0
    %306 = vmatpush.msra.mxu0 0.0
    %307 = vmatpush.msra.mxu0 0.0
    %308 = vmatpush.msra.mxu0 0.0
    %309 = vmatpush.msra.mxu0 0.0
    %310 = vmatpush.msra.mxu0 0.0
    %311 = vmatpush.msra.mxu0 0.0
    %312 = vmatpush.msra.mxu0 0.0
    %313 = vmatpush.msra.mxu0 %v68
    %314 = vmatpush.msra.mxu0 %v67
    %315 = vmatpush.msra.mxu0 %v66
    %316 = vmatpush.msra.mxu0 %v65
    %317 = vmatpush.msra.mxu0 %v64
    %318 = vmatpush.msra.mxu0 %v63
    %319 = vmatpush.msra.mxu0 %v62
    %320 = vmatpush.msra.mxu0 %v61
    %321 = vmatmul.f32.gmra.mxu0 %v303
    %v322 = vpop.f32.mrf.mxu0
    %v323 = vadd.f32 %v85, %v322
    %324 = vdwg.mxu0
    %v325 = vxor.u32 %v323, 2147483648
    %v326 = vmul.f32 %v325, 1.442695
    %v327 = vpow.pop %v326
    %v328 = vadd.f32 %v327, 1.0
    %v329 = vrcp.pop %v328
    %v330 = vmul.f32 %v328, %v329
    %v331 = vsub.f32 1.0, %v330
    %v332 = vmul.f32 %v329, %v331
    %v333 = vadd.f32 %v329, %v332
    %vm334 = vweird.f32 %v328
    %vm335 = vweird.f32 %v329
    %vm336 = vmor %vm334, %vm335
    %v337 = vsel %vm336, %v329, %v333
    %v338 = vand.u32 2147483647, %v328
    %vm339 = vcmp.eq.f32.partialorder %v338, 8.507059e+37
    %v340 = vand.u32 %v328, 2147483648
    %v341 = vor.u32 1.1754944e-38, %v340
    %v342 = vsel %vm339, %v341, %v337
    %v343 = vmul.f32 1.0, %v342
    %v344 = vtanh.pop %v323
    %v345 = vmul.f32 %v343, %v285
    %347 = vrot.lane.b32.xlu0 %v344, 32
    %v348 = vpop.permute.xlu0 %347
    %v350 = vmul.f32 %v343, %v348
    %352 = vrot.lane.b32.xlu0 %v350, 32
    %v353 = vpop.permute.xlu0 %352
    %v355 = vadd.f32 %v345, %v353
    %v356 = vtanh.pop %v355
    %358 = vrot.lane.b32.xlu0 %v356, 32
    %v359 = vpop.permute.xlu0 %358
    %v361 = vmul.f32 %v343, %v359
    %v364 = vrot.slane %v54, 7
    %v365 = vsel %vm75, %v364, %v53
    %368 = vrot.lane.b32.xlu0 %v361, 96
    %v369 = vpop.permute.xlu0 %368
    %v371 = vsel %vm82, %v365, %v369
    %v373 = vsel %vm87, %v371, 0
    %375 = vmatpush.msra.mxu0 0.0
    %376 = vmatpush.msra.mxu0 0.0
    %377 = vmatpush.msra.mxu0 0.0
    %378 = vmatpush.msra.mxu0 0.0
    %379 = vmatpush.msra.mxu0 0.0
    %380 = vmatpush.msra.mxu0 0.0
    %381 = vmatpush.msra.mxu0 0.0
    %382 = vmatpush.msra.mxu0 0.0
    %383 = vmatpush.msra.mxu0 %v68
    %384 = vmatpush.msra.mxu0 %v67
    %385 = vmatpush.msra.mxu0 %v66
    %386 = vmatpush.msra.mxu0 %v65
    %387 = vmatpush.msra.mxu0 %v64
    %388 = vmatpush.msra.mxu0 %v63
    %389 = vmatpush.msra.mxu0 %v62
    %390 = vmatpush.msra.mxu0 %v61
    %391 = vmatmul.f32.gmra.mxu0 %v373
    %v392 = vpop.f32.mrf.mxu0
    %v393 = vadd.f32 %v85, %v392
    %394 = vdwg.mxu0
    %v395 = vxor.u32 %v393, 2147483648
    %v396 = vmul.f32 %v395, 1.442695
    %v397 = vpow.pop %v396
    %v398 = vadd.f32 %v397, 1.0
    %v399 = vrcp.pop %v398
    %v400 = vmul.f32 %v398, %v399
    %v401 = vsub.f32 1.0, %v400
    %v402 = vmul.f32 %v399, %v401
    %v403 = vadd.f32 %v399, %v402
    %vm404 = vweird.f32 %v398
    %vm405 = vweird.f32 %v399
    %vm406 = vmor %vm404, %vm405
    %v407 = vsel %vm406, %v399, %v403
    %v408 = vand.u32 2147483647, %v398
    %vm409 = vcmp.eq.f32.partialorder %v408, 8.507059e+37
    %v410 = vand.u32 %v398, 2147483648
    %v411 = vor.u32 1.1754944e-38, %v410
    %v412 = vsel %vm409, %v411, %v407
    %v413 = vmul.f32 1.0, %v412
    %v414 = vtanh.pop %v393
    %v415 = vmul.f32 %v413, %v355
    %417 = vrot.lane.b32.xlu0 %v414, 32
    %v418 = vpop.permute.xlu0 %417
    %v420 = vmul.f32 %v413, %v418
    %422 = vrot.lane.b32.xlu0 %v420, 32
    %v423 = vpop.permute.xlu0 %422
    %v425 = vadd.f32 %v415, %v423
    %v426 = vtanh.pop %v425
    %428 = vrot.lane.b32.xlu0 %v426, 32
    %v429 = vpop.permute.xlu0 %428
    %v431 = vmul.f32 %v413, %v429
    %v434 = vrot.slane %v56, 7
    %v435 = vsel %vm75, %v434, %v55
    %438 = vrot.lane.b32.xlu0 %v431, 96
    %v439 = vpop.permute.xlu0 %438
    %v441 = vsel %vm82, %v435, %v439
    %v443 = vsel %vm87, %v441, 0
    %445 = vmatpush.msra.mxu0 0.0
    %446 = vmatpush.msra.mxu0 0.0
    %447 = vmatpush.msra.mxu0 0.0
    %448 = vmatpush.msra.mxu0 0.0
    %449 = vmatpush.msra.mxu0 0.0
    %450 = vmatpush.msra.mxu0 0.0
    %451 = vmatpush.msra.mxu0 0.0
    %452 = vmatpush.msra.mxu0 0.0
    %453 = vmatpush.msra.mxu0 %v68
    %454 = vmatpush.msra.mxu0 %v67
    %455 = vmatpush.msra.mxu0 %v66
    %456 = vmatpush.msra.mxu0 %v65
    %457 = vmatpush.msra.mxu0 %v64
    %458 = vmatpush.msra.mxu0 %v63
    %459 = vmatpush.msra.mxu0 %v62
    %460 = vmatpush.msra.mxu0 %v61
    %461 = vmatmul.f32.gmra.mxu0 %v443
    %v462 = vpop.f32.mrf.mxu0
    %v463 = vadd.f32 %v85, %v462
    %464 = vdwg.mxu0
    %v465 = vxor.u32 %v463, 2147483648
    %v466 = vmul.f32 %v465, 1.442695
    %v467 = vpow.pop %v466
    %v468 = vadd.f32 %v467, 1.0
    %v469 = vrcp.pop %v468
    %v470 = vmul.f32 %v468, %v469
    %v471 = vsub.f32 1.0, %v470
    %v472 = vmul.f32 %v469, %v471
    %v473 = vadd.f32 %v469, %v472
    %vm474 = vweird.f32 %v468
    %vm475 = vweird.f32 %v469
    %vm476 = vmor %vm474, %vm475
    %v477 = vsel %vm476, %v469, %v473
    %v478 = vand.u32 2147483647, %v468
    %vm479 = vcmp.eq.f32.partialorder %v478, 8.507059e+37
    %v480 = vand.u32 %v468, 2147483648
    %v481 = vor.u32 1.1754944e-38, %v480
    %v482 = vsel %vm479, %v481, %v477
    %v483 = vmul.f32 1.0, %v482
    %v484 = vtanh.pop %v463
    %v485 = vmul.f32 %v483, %v425
    %487 = vrot.lane.b32.xlu0 %v484, 32
    %v488 = vpop.permute.xlu0 %487
    %v490 = vmul.f32 %v483, %v488
    %492 = vrot.lane.b32.xlu0 %v490, 32
    %v493 = vpop.permute.xlu0 %492
    %v495 = vadd.f32 %v485, %v493
    %v496 = vtanh.pop %v495
    %498 = vrot.lane.b32.xlu0 %v496, 32
    %v499 = vpop.permute.xlu0 %498
    %v501 = vmul.f32 %v483, %v499
    %v504 = vrot.slane %v58, 7
    %v505 = vsel %vm75, %v504, %v57
    %508 = vrot.lane.b32.xlu0 %v501, 96
    %v509 = vpop.permute.xlu0 %508
    %v511 = vsel %vm82, %v505, %v509
    %v513 = vsel %vm87, %v511, 0
    %515 = vmatpush.msra.mxu0 0.0
    %516 = vmatpush.msra.mxu0 0.0
    %517 = vmatpush.msra.mxu0 0.0
    %518 = vmatpush.msra.mxu0 0.0
    %519 = vmatpush.msra.mxu0 0.0
    %520 = vmatpush.msra.mxu0 0.0
    %521 = vmatpush.msra.mxu0 0.0
    %522 = vmatpush.msra.mxu0 0.0
    %523 = vmatpush.msra.mxu0 %v68
    %524 = vmatpush.msra.mxu0 %v67
    %525 = vmatpush.msra.mxu0 %v66
    %526 = vmatpush.msra.mxu0 %v65
    %527 = vmatpush.msra.mxu0 %v64
    %528 = vmatpush.msra.mxu0 %v63
    %529 = vmatpush.msra.mxu0 %v62
    %530 = vmatpush.msra.mxu0 %v61
    %531 = vmatmul.f32.gmra.mxu0 %v513
    %v532 = vpop.f32.mrf.mxu0
    %v533 = vadd.f32 %v85, %v532
    %534 = vdwg.mxu0
    %v535 = vxor.u32 %v533, 2147483648
    %v536 = vmul.f32 %v535, 1.442695
    %v537 = vpow.pop %v536
    %v538 = vadd.f32 %v537, 1.0
    %v539 = vrcp.pop %v538
    %v540 = vmul.f32 %v538, %v539
    %v541 = vsub.f32 1.0, %v540
    %v542 = vmul.f32 %v539, %v541
    %v543 = vadd.f32 %v539, %v542
    %vm544 = vweird.f32 %v538
    %vm545 = vweird.f32 %v539
    %vm546 = vmor %vm544, %vm545
    %v547 = vsel %vm546, %v539, %v543
    %v548 = vand.u32 2147483647, %v538
    %vm549 = vcmp.eq.f32.partialorder %v548, 8.507059e+37
    %v550 = vand.u32 %v538, 2147483648
    %v551 = vor.u32 1.1754944e-38, %v550
    %v552 = vsel %vm549, %v551, %v547
    %v553 = vmul.f32 1.0, %v552
    %v554 = vtanh.pop %v533
    %v555 = vmul.f32 %v553, %v495
    %557 = vrot.lane.b32.xlu0 %v554, 32
    %v558 = vpop.permute.xlu0 %557
    %v560 = vmul.f32 %v553, %v558
    %562 = vrot.lane.b32.xlu0 %v560, 32
    %v563 = vpop.permute.xlu0 %562
    %v565 = vadd.f32 %v555, %v563
    %v566 = vtanh.pop %v565
    %568 = vrot.lane.b32.xlu0 %v566, 32
    %v569 = vpop.permute.xlu0 %568
    %v571 = vmul.f32 %v553, %v569
    %v574 = vrot.slane %v60, 7
    %v575 = vsel %vm75, %v574, %v59
    %578 = vrot.lane.b32.xlu0 %v571, 96
    %v579 = vpop.permute.xlu0 %578
    %v581 = vsel %vm82, %v575, %v579
    %v583 = vsel %vm87, %v581, 0
    %585 = vmatpush.msra.mxu0 0.0
    %586 = vmatpush.msra.mxu0 0.0
    %587 = vmatpush.msra.mxu0 0.0
    %588 = vmatpush.msra.mxu0 0.0
    %589 = vmatpush.msra.mxu0 0.0
    %590 = vmatpush.msra.mxu0 0.0
    %591 = vmatpush.msra.mxu0 0.0
    %592 = vmatpush.msra.mxu0 0.0
    %593 = vmatpush.msra.mxu0 %v68
    %594 = vmatpush.msra.mxu0 %v67
    %595 = vmatpush.msra.mxu0 %v66
    %596 = vmatpush.msra.mxu0 %v65
    %597 = vmatpush.msra.mxu0 %v64
    %598 = vmatpush.msra.mxu0 %v63
    %599 = vmatpush.msra.mxu0 %v62
    %600 = vmatpush.msra.mxu0 %v61
    %601 = vmatmul.f32.gmra.mxu0 %v583
    %v602 = vpop.f32.mrf.mxu0
    %v603 = vadd.f32 %v85, %v602
    %604 = vdwg.mxu0
    %v605 = vxor.u32 %v603, 2147483648
    %v606 = vmul.f32 %v605, 1.442695
    %v607 = vpow.pop %v606
    %v608 = vadd.f32 %v607, 1.0
    %v609 = vrcp.pop %v608
    %v610 = vmul.f32 %v608, %v609
    %v611 = vsub.f32 1.0, %v610
    %v612 = vmul.f32 %v609, %v611
    %v613 = vadd.f32 %v609, %v612
    %vm614 = vweird.f32 %v608
    %vm615 = vweird.f32 %v609
    %vm616 = vmor %vm614, %vm615
    %v617 = vsel %vm616, %v609, %v613
    %v618 = vand.u32 2147483647, %v608
    %vm619 = vcmp.eq.f32.partialorder %v618, 8.507059e+37
    %v620 = vand.u32 %v608, 2147483648
    %v621 = vor.u32 1.1754944e-38, %v620
    %v622 = vsel %vm619, %v621, %v617
    %v623 = vmul.f32 1.0, %v622
    %v624 = vtanh.pop %v603
    %v625 = vmul.f32 %v623, %v565
    %627 = vrot.lane.b32.xlu0 %v624, 32
    %v628 = vpop.permute.xlu0 %627
    %v630 = vmul.f32 %v623, %v628
    %632 = vrot.lane.b32.xlu0 %v630, 32
    %v633 = vpop.permute.xlu0 %632
    %v635 = vadd.f32 %v625, %v633
    %v636 = vtanh.pop %v635
    %638 = vrot.lane.b32.xlu0 %v636, 32
    %v639 = vpop.permute.xlu0 %638
    %v641 = vmul.f32 %v623, %v639
    %643 = vrot.lane.b32.xlu0 %v641, 64
    %v644 = vpop.permute.xlu0 %643
    %vm646 = vcmask 254976
    %647 = vst.msk [vmem:[#allocation6] sm:$0x3] %vm646, %v644
    %649 = vrot.lane.b32.xlu0 %v635, 96
    %v650 = vpop.permute.xlu0 %649
    %652 = vst.msk [vmem:[#allocation7] sm:$0x3] %vm646, %v650
    %v653 = vld [vmem:[%s5] sm:$0xff]
    %v654 = vld [vmem:[%s5 + $0x8] sm:$0xff]
    %v655 = vld [vmem:[%s5 + $0x10] sm:$0xff]
    %v656 = vld [vmem:[%s5 + $0x18] sm:$0xff]
    %v657 = vld [vmem:[%s5 + $0x20] sm:$0xff]
    %v658 = vld [vmem:[%s5 + $0x28] sm:$0xff]
    %v659 = vld [vmem:[%s5 + $0x30] sm:$0xff]
    %v660 = vld [vmem:[%s5 + $0x38] sm:$0xff]
    %v661 = vld [vmem:[%s6] sm:$0x1]
    %s662 = scalar_lea.vmem %s1, 2
    %v663 = vld [vmem:[%s662] sm:$0x3]
    %s664 = scalar_lea.vmem %s2, 2
    %v665 = vld [vmem:[%s664] sm:$0x3]
    %666 = vrot.lane.b32.xlu0 %v151, 64
    %v667 = vpop.permute.xlu0 %666
    %670 = vrot.lane.b32.xlu0 %v663, 32
    %v671 = vpop.permute.xlu0 %670
    %v673 = vsel %vm82, %v667, %v671
    %v675 = vperm.slane %v661, 0
    %v678 = vsel %vm87, %v673, 0
    %680 = vmatpush.msra.mxu0 0.0
    %681 = vmatpush.msra.mxu0 0.0
    %682 = vmatpush.msra.mxu0 0.0
    %683 = vmatpush.msra.mxu0 0.0
    %684 = vmatpush.msra.mxu0 0.0
    %685 = vmatpush.msra.mxu0 0.0
    %686 = vmatpush.msra.mxu0 0.0
    %687 = vmatpush.msra.mxu0 0.0
    %688 = vmatpush.msra.mxu0 %v660
    %689 = vmatpush.msra.mxu0 %v659
    %690 = vmatpush.msra.mxu0 %v658
    %691 = vmatpush.msra.mxu0 %v657
    %692 = vmatpush.msra.mxu0 %v656
    %693 = vmatpush.msra.mxu0 %v655
    %694 = vmatpush.msra.mxu0 %v654
    %695 = vmatpush.msra.mxu0 %v653
    %696 = vmatmul.f32.gmra.mxu0 %v678
    %v697 = vpop.f32.mrf.mxu0
    %v698 = vadd.f32 %v675, %v697
    %699 = vdwg.mxu0
    %v700 = vxor.u32 %v698, 2147483648
    %v701 = vmul.f32 %v700, 1.442695
    %v702 = vpow.pop %v701
    %v703 = vadd.f32 %v702, 1.0
    %v704 = vrcp.pop %v703
    %v705 = vmul.f32 %v703, %v704
    %v706 = vsub.f32 1.0, %v705
    %v707 = vmul.f32 %v704, %v706
    %v708 = vadd.f32 %v704, %v707
    %vm709 = vweird.f32 %v703
    %vm710 = vweird.f32 %v704
    %vm711 = vmor %vm709, %vm710
    %v712 = vsel %vm711, %v704, %v708
    %v713 = vand.u32 2147483647, %v703
    %vm714 = vcmp.eq.f32.partialorder %v713, 8.507059e+37
    %v715 = vand.u32 %v703, 2147483648
    %v716 = vor.u32 1.1754944e-38, %v715
    %v717 = vsel %vm714, %v716, %v712
    %v718 = vmul.f32 1.0, %v717
    %v719 = vtanh.pop %v698
    %721 = vrot.lane.b32.xlu0 %v665, 32
    %v722 = vpop.permute.xlu0 %721
    %v724 = vmul.f32 %v718, %v722
    %726 = vrot.lane.b32.xlu0 %v719, 32
    %v727 = vpop.permute.xlu0 %726
    %v729 = vmul.f32 %v718, %v727
    %731 = vrot.lane.b32.xlu0 %v729, 32
    %v732 = vpop.permute.xlu0 %731
    %v734 = vadd.f32 %v724, %v732
    %v735 = vtanh.pop %v734
    %737 = vrot.lane.b32.xlu0 %v735, 32
    %v738 = vpop.permute.xlu0 %737
    %v740 = vmul.f32 %v718, %v738
    %741 = vrot.lane.b32.xlu0 %v221, 64
    %v742 = vpop.permute.xlu0 %741
    %745 = vrot.lane.b32.xlu0 %v740, 96
    %v746 = vpop.permute.xlu0 %745
    %v748 = vsel %vm82, %v742, %v746
    %v750 = vsel %vm87, %v748, 0
    %752 = vmatpush.msra.mxu0 0.0
    %753 = vmatpush.msra.mxu0 0.0
    %754 = vmatpush.msra.mxu0 0.0
    %755 = vmatpush.msra.mxu0 0.0
    %756 = vmatpush.msra.mxu0 0.0
    %757 = vmatpush.msra.mxu0 0.0
    %758 = vmatpush.msra.mxu0 0.0
    %759 = vmatpush.msra.mxu0 0.0
    %760 = vmatpush.msra.mxu0 %v660
    %761 = vmatpush.msra.mxu0 %v659
    %762 = vmatpush.msra.mxu0 %v658
    %763 = vmatpush.msra.mxu0 %v657
    %764 = vmatpush.msra.mxu0 %v656
    %765 = vmatpush.msra.mxu0 %v655
    %766 = vmatpush.msra.mxu0 %v654
    %767 = vmatpush.msra.mxu0 %v653
    %768 = vmatmul.f32.gmra.mxu0 %v750
    %v769 = vpop.f32.mrf.mxu0
    %v770 = vadd.f32 %v675, %v769
    %771 = vdwg.mxu0
    %v772 = vxor.u32 %v770, 2147483648
    %v773 = vmul.f32 %v772, 1.442695
    %v774 = vpow.pop %v773
    %v775 = vadd.f32 %v774, 1.0
    %v776 = vrcp.pop %v775
    %v777 = vmul.f32 %v775, %v776
    %v778 = vsub.f32 1.0, %v777
    %v779 = vmul.f32 %v776, %v778
    %v780 = vadd.f32 %v776, %v779
    %vm781 = vweird.f32 %v775
    %vm782 = vweird.f32 %v776
    %vm783 = vmor %vm781, %vm782
    %v784 = vsel %vm783, %v776, %v780
    %v785 = vand.u32 2147483647, %v775
    %vm786 = vcmp.eq.f32.partialorder %v785, 8.507059e+37
    %v787 = vand.u32 %v775, 2147483648
    %v788 = vor.u32 1.1754944e-38, %v787
    %v789 = vsel %vm786, %v788, %v784
    %v790 = vmul.f32 1.0, %v789
    %v791 = vtanh.pop %v770
    %v792 = vmul.f32 %v790, %v734
    %794 = vrot.lane.b32.xlu0 %v791, 32
    %v795 = vpop.permute.xlu0 %794
    %v797 = vmul.f32 %v790, %v795
    %799 = vrot.lane.b32.xlu0 %v797, 32
    %v800 = vpop.permute.xlu0 %799
    %v802 = vadd.f32 %v792, %v800
    %v803 = vtanh.pop %v802
    %805 = vrot.lane.b32.xlu0 %v803, 32
    %v806 = vpop.permute.xlu0 %805
    %v808 = vmul.f32 %v790, %v806
    %809 = vrot.lane.b32.xlu0 %v291, 64
    %v810 = vpop.permute.xlu0 %809
    %813 = vrot.lane.b32.xlu0 %v808, 96
    %v814 = vpop.permute.xlu0 %813
    %v816 = vsel %vm82, %v810, %v814
    %v818 = vsel %vm87, %v816, 0
    %820 = vmatpush.msra.mxu0 0.0
    %821 = vmatpush.msra.mxu0 0.0
    %822 = vmatpush.msra.mxu0 0.0
    %823 = vmatpush.msra.mxu0 0.0
    %824 = vmatpush.msra.mxu0 0.0
    %825 = vmatpush.msra.mxu0 0.0
    %826 = vmatpush.msra.mxu0 0.0
    %827 = vmatpush.msra.mxu0 0.0
    %828 = vmatpush.msra.mxu0 %v660
    %829 = vmatpush.msra.mxu0 %v659
    %830 = vmatpush.msra.mxu0 %v658
    %831 = vmatpush.msra.mxu0 %v657
    %832 = vmatpush.msra.mxu0 %v656
    %833 = vmatpush.msra.mxu0 %v655
    %834 = vmatpush.msra.mxu0 %v654
    %835 = vmatpush.msra.mxu0 %v653
    %836 = vmatmul.f32.gmra.mxu0 %v818
    %v837 = vpop.f32.mrf.mxu0
    %v838 = vadd.f32 %v675, %v837
    %839 = vdwg.mxu0
    %v840 = vxor.u32 %v838, 2147483648
    %v841 = vmul.f32 %v840, 1.442695
    %v842 = vpow.pop %v841
    %v843 = vadd.f32 %v842, 1.0
    %v844 = vrcp.pop %v843
    %v845 = vmul.f32 %v843, %v844
    %v846 = vsub.f32 1.0, %v845
    %v847 = vmul.f32 %v844, %v846
    %v848 = vadd.f32 %v844, %v847
    %vm849 = vweird.f32 %v843
    %vm850 = vweird.f32 %v844
    %vm851 = vmor %vm849, %vm850
    %v852 = vsel %vm851, %v844, %v848
    %v853 = vand.u32 2147483647, %v843
    %vm854 = vcmp.eq.f32.partialorder %v853, 8.507059e+37
    %v855 = vand.u32 %v843, 2147483648
    %v856 = vor.u32 1.1754944e-38, %v855
    %v857 = vsel %vm854, %v856, %v852
    %v858 = vmul.f32 1.0, %v857
    %v859 = vtanh.pop %v838
    %v860 = vmul.f32 %v858, %v802
    %862 = vrot.lane.b32.xlu0 %v859, 32
    %v863 = vpop.permute.xlu0 %862
    %v865 = vmul.f32 %v858, %v863
    %867 = vrot.lane.b32.xlu0 %v865, 32
    %v868 = vpop.permute.xlu0 %867
    %v870 = vadd.f32 %v860, %v868
    %v871 = vtanh.pop %v870
    %873 = vrot.lane.b32.xlu0 %v871, 32
    %v874 = vpop.permute.xlu0 %873
    %v876 = vmul.f32 %v858, %v874
    %877 = vrot.lane.b32.xlu0 %v361, 64
    %v878 = vpop.permute.xlu0 %877
    %881 = vrot.lane.b32.xlu0 %v876, 96
    %v882 = vpop.permute.xlu0 %881
    %v884 = vsel %vm82, %v878, %v882
    %v886 = vsel %vm87, %v884, 0
    %888 = vmatpush.msra.mxu0 0.0
    %889 = vmatpush.msra.mxu0 0.0
    %890 = vmatpush.msra.mxu0 0.0
    %891 = vmatpush.msra.mxu0 0.0
    %892 = vmatpush.msra.mxu0 0.0
    %893 = vmatpush.msra.mxu0 0.0
    %894 = vmatpush.msra.mxu0 0.0
    %895 = vmatpush.msra.mxu0 0.0
    %896 = vmatpush.msra.mxu0 %v660
    %897 = vmatpush.msra.mxu0 %v659
    %898 = vmatpush.msra.mxu0 %v658
    %899 = vmatpush.msra.mxu0 %v657
    %900 = vmatpush.msra.mxu0 %v656
    %901 = vmatpush.msra.mxu0 %v655
    %902 = vmatpush.msra.mxu0 %v654
    %903 = vmatpush.msra.mxu0 %v653
    %904 = vmatmul.f32.gmra.mxu0 %v886
    %v905 = vpop.f32.mrf.mxu0
    %v906 = vadd.f32 %v675, %v905
    %907 = vdwg.mxu0
    %v908 = vxor.u32 %v906, 2147483648
    %v909 = vmul.f32 %v908, 1.442695
    %v910 = vpow.pop %v909
    %v911 = vadd.f32 %v910, 1.0
    %v912 = vrcp.pop %v911
    %v913 = vmul.f32 %v911, %v912
    %v914 = vsub.f32 1.0, %v913
    %v915 = vmul.f32 %v912, %v914
    %v916 = vadd.f32 %v912, %v915
    %vm917 = vweird.f32 %v911
    %vm918 = vweird.f32 %v912
    %vm919 = vmor %vm917, %vm918
    %v920 = vsel %vm919, %v912, %v916
    %v921 = vand.u32 2147483647, %v911
    %vm922 = vcmp.eq.f32.partialorder %v921, 8.507059e+37
    %v923 = vand.u32 %v911, 2147483648
    %v924 = vor.u32 1.1754944e-38, %v923
    %v925 = vsel %vm922, %v924, %v920
    %v926 = vmul.f32 1.0, %v925
    %v927 = vtanh.pop %v906
    %v928 = vmul.f32 %v926, %v870
    %930 = vrot.lane.b32.xlu0 %v927, 32
    %v931 = vpop.permute.xlu0 %930
    %v933 = vmul.f32 %v926, %v931
    %935 = vrot.lane.b32.xlu0 %v933, 32
    %v936 = vpop.permute.xlu0 %935
    %v938 = vadd.f32 %v928, %v936
    %v939 = vtanh.pop %v938
    %941 = vrot.lane.b32.xlu0 %v939, 32
    %v942 = vpop.permute.xlu0 %941
    %v944 = vmul.f32 %v926, %v942
    %945 = vrot.lane.b32.xlu0 %v431, 64
    %v946 = vpop.permute.xlu0 %945
    %949 = vrot.lane.b32.xlu0 %v944, 96
    %v950 = vpop.permute.xlu0 %949
    %v952 = vsel %vm82, %v946, %v950
    %v954 = vsel %vm87, %v952, 0
    %956 = vmatpush.msra.mxu0 0.0
    %957 = vmatpush.msra.mxu0 0.0
    %958 = vmatpush.msra.mxu0 0.0
    %959 = vmatpush.msra.mxu0 0.0
    %960 = vmatpush.msra.mxu0 0.0
    %961 = vmatpush.msra.mxu0 0.0
    %962 = vmatpush.msra.mxu0 0.0
    %963 = vmatpush.msra.mxu0 0.0
    %964 = vmatpush.msra.mxu0 %v660
    %965 = vmatpush.msra.mxu0 %v659
    %966 = vmatpush.msra.mxu0 %v658
    %967 = vmatpush.msra.mxu0 %v657
    %968 = vmatpush.msra.mxu0 %v656
    %969 = vmatpush.msra.mxu0 %v655
    %970 = vmatpush.msra.mxu0 %v654
    %971 = vmatpush.msra.mxu0 %v653
    %972 = vmatmul.f32.gmra.mxu0 %v954
    %v973 = vpop.f32.mrf.mxu0
    %v974 = vadd.f32 %v675, %v973
    %975 = vdwg.mxu0
    %v976 = vxor.u32 %v974, 2147483648
    %v977 = vmul.f32 %v976, 1.442695
    %v978 = vpow.pop %v977
    %v979 = vadd.f32 %v978, 1.0
    %v980 = vrcp.pop %v979
    %v981 = vmul.f32 %v979, %v980
    %v982 = vsub.f32 1.0, %v981
    %v983 = vmul.f32 %v980, %v982
    %v984 = vadd.f32 %v980, %v983
    %vm985 = vweird.f32 %v979
    %vm986 = vweird.f32 %v980
    %vm987 = vmor %vm985, %vm986
    %v988 = vsel %vm987, %v980, %v984
    %v989 = vand.u32 2147483647, %v979
    %vm990 = vcmp.eq.f32.partialorder %v989, 8.507059e+37
    %v991 = vand.u32 %v979, 2147483648
    %v992 = vor.u32 1.1754944e-38, %v991
    %v993 = vsel %vm990, %v992, %v988
    %v994 = vmul.f32 1.0, %v993
    %v995 = vtanh.pop %v974
    %v996 = vmul.f32 %v994, %v938
    %998 = vrot.lane.b32.xlu0 %v995, 32
    %v999 = vpop.permute.xlu0 %998
    %v1001 = vmul.f32 %v994, %v999
    %1003 = vrot.lane.b32.xlu0 %v1001, 32
    %v1004 = vpop.permute.xlu0 %1003
    %v1006 = vadd.f32 %v996, %v1004
    %v1007 = vtanh.pop %v1006
    %1009 = vrot.lane.b32.xlu0 %v1007, 32
    %v1010 = vpop.permute.xlu0 %1009
    %v1012 = vmul.f32 %v994, %v1010
    %1013 = vrot.lane.b32.xlu0 %v501, 64
    %v1014 = vpop.permute.xlu0 %1013
    %1017 = vrot.lane.b32.xlu0 %v1012, 96
    %v1018 = vpop.permute.xlu0 %1017
    %v1020 = vsel %vm82, %v1014, %v1018
    %v1022 = vsel %vm87, %v1020, 0
    %1024 = vmatpush.msra.mxu0 0.0
    %1025 = vmatpush.msra.mxu0 0.0
    %1026 = vmatpush.msra.mxu0 0.0
    %1027 = vmatpush.msra.mxu0 0.0
    %1028 = vmatpush.msra.mxu0 0.0
    %1029 = vmatpush.msra.mxu0 0.0
    %1030 = vmatpush.msra.mxu0 0.0
    %1031 = vmatpush.msra.mxu0 0.0
    %1032 = vmatpush.msra.mxu0 %v660
    %1033 = vmatpush.msra.mxu0 %v659
    %1034 = vmatpush.msra.mxu0 %v658
    %1035 = vmatpush.msra.mxu0 %v657
    %1036 = vmatpush.msra.mxu0 %v656
    %1037 = vmatpush.msra.mxu0 %v655
    %1038 = vmatpush.msra.mxu0 %v654
    %1039 = vmatpush.msra.mxu0 %v653
    %1040 = vmatmul.f32.gmra.mxu0 %v1022
    %v1041 = vpop.f32.mrf.mxu0
    %v1042 = vadd.f32 %v675, %v1041
    %1043 = vdwg.mxu0
    %v1044 = vxor.u32 %v1042, 2147483648
    %v1045 = vmul.f32 %v1044, 1.442695
    %v1046 = vpow.pop %v1045
    %v1047 = vadd.f32 %v1046, 1.0
    %v1048 = vrcp.pop %v1047
    %v1049 = vmul.f32 %v1047, %v1048
    %v1050 = vsub.f32 1.0, %v1049
    %v1051 = vmul.f32 %v1048, %v1050
    %v1052 = vadd.f32 %v1048, %v1051
    %vm1053 = vweird.f32 %v1047
    %vm1054 = vweird.f32 %v1048
    %vm1055 = vmor %vm1053, %vm1054
    %v1056 = vsel %vm1055, %v1048, %v1052
    %v1057 = vand.u32 2147483647, %v1047
    %vm1058 = vcmp.eq.f32.partialorder %v1057, 8.507059e+37
    %v1059 = vand.u32 %v1047, 2147483648
    %v1060 = vor.u32 1.1754944e-38, %v1059
    %v1061 = vsel %vm1058, %v1060, %v1056
    %v1062 = vmul.f32 1.0, %v1061
    %v1063 = vtanh.pop %v1042
    %v1064 = vmul.f32 %v1062, %v1006
    %1066 = vrot.lane.b32.xlu0 %v1063, 32
    %v1067 = vpop.permute.xlu0 %1066
    %v1069 = vmul.f32 %v1062, %v1067
    %1071 = vrot.lane.b32.xlu0 %v1069, 32
    %v1072 = vpop.permute.xlu0 %1071
    %v1074 = vadd.f32 %v1064, %v1072
    %v1075 = vtanh.pop %v1074
    %1077 = vrot.lane.b32.xlu0 %v1075, 32
    %v1078 = vpop.permute.xlu0 %1077
    %v1080 = vmul.f32 %v1062, %v1078
    %1081 = vrot.lane.b32.xlu0 %v571, 64
    %v1082 = vpop.permute.xlu0 %1081
    %1085 = vrot.lane.b32.xlu0 %v1080, 96
    %v1086 = vpop.permute.xlu0 %1085
    %v1088 = vsel %vm82, %v1082, %v1086
    %v1090 = vsel %vm87, %v1088, 0
    %1092 = vmatpush.msra.mxu0 0.0
    %1093 = vmatpush.msra.mxu0 0.0
    %1094 = vmatpush.msra.mxu0 0.0
    %1095 = vmatpush.msra.mxu0 0.0
    %1096 = vmatpush.msra.mxu0 0.0
    %1097 = vmatpush.msra.mxu0 0.0
    %1098 = vmatpush.msra.mxu0 0.0
    %1099 = vmatpush.msra.mxu0 0.0
    %1100 = vmatpush.msra.mxu0 %v660
    %1101 = vmatpush.msra.mxu0 %v659
    %1102 = vmatpush.msra.mxu0 %v658
    %1103 = vmatpush.msra.mxu0 %v657
    %1104 = vmatpush.msra.mxu0 %v656
    %1105 = vmatpush.msra.mxu0 %v655
    %1106 = vmatpush.msra.mxu0 %v654
    %1107 = vmatpush.msra.mxu0 %v653
    %1108 = vmatmul.f32.gmra.mxu0 %v1090
    %v1109 = vpop.f32.mrf.mxu0
    %v1110 = vadd.f32 %v675, %v1109
    %1111 = vdwg.mxu0
    %v1112 = vxor.u32 %v1110, 2147483648
    %v1113 = vmul.f32 %v1112, 1.442695
    %v1114 = vpow.pop %v1113
    %v1115 = vadd.f32 %v1114, 1.0
    %v1116 = vrcp.pop %v1115
    %v1117 = vmul.f32 %v1115, %v1116
    %v1118 = vsub.f32 1.0, %v1117
    %v1119 = vmul.f32 %v1116, %v1118
    %v1120 = vadd.f32 %v1116, %v1119
    %vm1121 = vweird.f32 %v1115
    %vm1122 = vweird.f32 %v1116
    %vm1123 = vmor %vm1121, %vm1122
    %v1124 = vsel %vm1123, %v1116, %v1120
    %v1125 = vand.u32 2147483647, %v1115
    %vm1126 = vcmp.eq.f32.partialorder %v1125, 8.507059e+37
    %v1127 = vand.u32 %v1115, 2147483648
    %v1128 = vor.u32 1.1754944e-38, %v1127
    %v1129 = vsel %vm1126, %v1128, %v1124
    %v1130 = vmul.f32 1.0, %v1129
    %v1131 = vtanh.pop %v1110
    %v1132 = vmul.f32 %v1130, %v1074
    %1134 = vrot.lane.b32.xlu0 %v1131, 32
    %v1135 = vpop.permute.xlu0 %1134
    %v1137 = vmul.f32 %v1130, %v1135
    %1139 = vrot.lane.b32.xlu0 %v1137, 32
    %v1140 = vpop.permute.xlu0 %1139
    %v1142 = vadd.f32 %v1132, %v1140
    %v1143 = vtanh.pop %v1142
    %1145 = vrot.lane.b32.xlu0 %v1143, 32
    %v1146 = vpop.permute.xlu0 %1145
    %v1148 = vmul.f32 %v1130, %v1146
    %1150 = vrot.lane.b32.xlu0 %v1148, 96
    %v1151 = vpop.permute.xlu0 %1150
    %v1153 = vsel %vm82, %v644, %v1151
    %v1155 = vsel %vm87, %v1153, 0
    %1157 = vmatpush.msra.mxu0 0.0
    %1158 = vmatpush.msra.mxu0 0.0
    %1159 = vmatpush.msra.mxu0 0.0
    %1160 = vmatpush.msra.mxu0 0.0
    %1161 = vmatpush.msra.mxu0 0.0
    %1162 = vmatpush.msra.mxu0 0.0
    %1163 = vmatpush.msra.mxu0 0.0
    %1164 = vmatpush.msra.mxu0 0.0
    %1165 = vmatpush.msra.mxu0 %v660
    %1166 = vmatpush.msra.mxu0 %v659
    %1167 = vmatpush.msra.mxu0 %v658
    %1168 = vmatpush.msra.mxu0 %v657
    %1169 = vmatpush.msra.mxu0 %v656
    %1170 = vmatpush.msra.mxu0 %v655
    %1171 = vmatpush.msra.mxu0 %v654
    %1172 = vmatpush.msra.mxu0 %v653
    %1173 = vmatmul.f32.gmra.mxu0 %v1155
    %v1174 = vpop.f32.mrf.mxu0
    %v1175 = vadd.f32 %v675, %v1174
    %1176 = vdwg.mxu0
    %v1177 = vxor.u32 %v1175, 2147483648
    %v1178 = vmul.f32 %v1177, 1.442695
    %v1179 = vpow.pop %v1178
    %v1180 = vadd.f32 %v1179, 1.0
    %v1181 = vrcp.pop %v1180
    %v1182 = vmul.f32 %v1180, %v1181
    %v1183 = vsub.f32 1.0, %v1182
    %v1184 = vmul.f32 %v1181, %v1183
    %v1185 = vadd.f32 %v1181, %v1184
    %vm1186 = vweird.f32 %v1180
    %vm1187 = vweird.f32 %v1181
    %vm1188 = vmor %vm1186, %vm1187
    %v1189 = vsel %vm1188, %v1181, %v1185
    %v1190 = vand.u32 2147483647, %v1180
    %vm1191 = vcmp.eq.f32.partialorder %v1190, 8.507059e+37
    %v1192 = vand.u32 %v1180, 2147483648
    %v1193 = vor.u32 1.1754944e-38, %v1192
    %v1194 = vsel %vm1191, %v1193, %v1189
    %v1195 = vmul.f32 1.0, %v1194
    %v1196 = vtanh.pop %v1175
    %v1197 = vmul.f32 %v1195, %v1142
    %1199 = vrot.lane.b32.xlu0 %v1196, 32
    %v1200 = vpop.permute.xlu0 %1199
    %v1202 = vmul.f32 %v1195, %v1200
    %1204 = vrot.lane.b32.xlu0 %v1202, 32
    %v1205 = vpop.permute.xlu0 %1204
    %v1207 = vadd.f32 %v1197, %v1205
    %v1208 = vtanh.pop %v1207
    %1210 = vrot.lane.b32.xlu0 %v1208, 32
    %v1211 = vpop.permute.xlu0 %1210
    %v1213 = vmul.f32 %v1195, %v1211
    %1215 = vrot.lane.b32.xlu0 %v1213, 64
    %v1216 = vpop.permute.xlu0 %1215
    %s1218 = scalar_lea.vmem [#allocation6], 2
    %1219 = vst.msk [vmem:[%s1218] sm:$0x3] %vm646, %v1216
    %1221 = vrot.lane.b32.xlu0 %v1207, 96
    %v1222 = vpop.permute.xlu0 %1221
    %s1224 = scalar_lea.vmem [#allocation7], 2
    %1225 = vst.msk [vmem:[%s1224] sm:$0x3] %vm646, %v1222
    %v1226 = vld [vmem:[%s7] sm:$0xff]
    %v1227 = vld [vmem:[%s7 + $0x8] sm:$0xff]
    %v1228 = vld [vmem:[%s7 + $0x10] sm:$0xff]
    %v1229 = vld [vmem:[%s7 + $0x18] sm:$0xff]
    %v1230 = vld [vmem:[%s8] sm:$0x1]
    %v1231 = vld [vmem:[%s9] sm:$0xff]
    %v1232 = vld [vmem:[%s9 + $0x8] sm:$0xff]
    %v1233 = vld [vmem:[%s9 + $0x10] sm:$0xff]
    %v1234 = vld [vmem:[%s9 + $0x18] sm:$0xff]
    %v1235 = vld [vmem:[%s10] sm:$0x1]
    %v1237 = vperm.slane %v1230, 0
    %1239 = vrot.lane.b32.xlu0 %v740, 64
    %v1240 = vpop.permute.xlu0 %1239
    %v1241 = vsel %vm82, %v1240, 0
    %1243 = vmatpush.msra.mxu0 0.0
    %1244 = vmatpush.msra.mxu0 0.0
    %1245 = vmatpush.msra.mxu0 0.0
    %1246 = vmatpush.msra.mxu0 0.0
    %1247 = vmatpush.msra.mxu0 0.0
    %1248 = vmatpush.msra.mxu0 0.0
    %1249 = vmatpush.msra.mxu0 0.0
    %1250 = vmatpush.msra.mxu0 0.0
    %1251 = vmatpush.msra.mxu0 0.0
    %1252 = vmatpush.msra.mxu0 0.0
    %1253 = vmatpush.msra.mxu0 0.0
    %1254 = vmatpush.msra.mxu0 0.0
    %1255 = vmatpush.msra.mxu0 %v1229
    %1256 = vmatpush.msra.mxu0 %v1228
    %1257 = vmatpush.msra.mxu0 %v1227
    %1258 = vmatpush.msra.mxu0 %v1226
    %1259 = vmatmul.f32.gmra.mxu0 %v1241
    %v1260 = vpop.f32.mrf.mxu0
    %v1261 = vadd.f32 %v1237, %v1260
    %1262 = vdwg.mxu0
    %v1264 = vrot.slane %v1261, 1
    %vm1266 = vcmask 122880
    %1267 = vst.msk [vmem:[#allocation2] sm:$0x1] %vm1266, %v1261
    %1268 = vst.msk [vmem:[#allocation2 + $0x8] sm:$0x1] %vm1266, %v1264
    %v1269 = vld [vmem:[%s0] sm:$0x1]
    %v1270 = vld [vmem:[%s0 + $0x8] sm:$0x1]
    %v1272 = vperm.slane %v1235, 0
    %v1276 = vrot.slane %v1270, 7
    %v1277 = vsel %vm75, %v1276, %v1269
    %v1278 = vsel %vm82, %v1277, 0
    %1280 = vmatpush.msra.mxu0 0.0
    %1281 = vmatpush.msra.mxu0 0.0
    %1282 = vmatpush.msra.mxu0 0.0
    %1283 = vmatpush.msra.mxu0 0.0
    %1284 = vmatpush.msra.mxu0 0.0
    %1285 = vmatpush.msra.mxu0 0.0
    %1286 = vmatpush.msra.mxu0 0.0
    %1287 = vmatpush.msra.mxu0 0.0
    %1288 = vmatpush.msra.mxu0 0.0
    %1289 = vmatpush.msra.mxu0 0.0
    %1290 = vmatpush.msra.mxu0 0.0
    %1291 = vmatpush.msra.mxu0 0.0
    %1292 = vmatpush.msra.mxu0 %v1234
    %1293 = vmatpush.msra.mxu0 %v1233
    %1294 = vmatpush.msra.mxu0 %v1232
    %1295 = vmatpush.msra.mxu0 %v1231
    %1296 = vmatmul.f32.gmra.mxu0 %v1278
    %v1297 = vpop.f32.mrf.mxu0
    %v1298 = vadd.f32 %v1272, %v1297
    %1299 = vdwg.mxu0
    %v1301 = vrot.slane %v1298, 1
    %vm1303 = vcmask 57344
    %1304 = vst.msk [vmem:[#allocation4] sm:$0x1] %vm1303, %v1298
    %1305 = vst.msk [vmem:[#allocation4 + $0x8] sm:$0x1] %vm1303, %v1301
    %1306 = vrot.lane.b32.xlu0 %v808, 64
    %v1307 = vpop.permute.xlu0 %1306
    %v1308 = vsel %vm82, %v1307, 0
    %1310 = vmatpush.msra.mxu0 0.0
    %1311 = vmatpush.msra.mxu0 0.0
    %1312 = vmatpush.msra.mxu0 0.0
    %1313 = vmatpush.msra.mxu0 0.0
    %1314 = vmatpush.msra.mxu0 0.0
    %1315 = vmatpush.msra.mxu0 0.0
    %1316 = vmatpush.msra.mxu0 0.0
    %1317 = vmatpush.msra.mxu0 0.0
    %1318 = vmatpush.msra.mxu0 0.0
    %1319 = vmatpush.msra.mxu0 0.0
    %1320 = vmatpush.msra.mxu0 0.0
    %1321 = vmatpush.msra.mxu0 0.0
    %1322 = vmatpush.msra.mxu0 %v1229
    %1323 = vmatpush.msra.mxu0 %v1228
    %1324 = vmatpush.msra.mxu0 %v1227
    %1325 = vmatpush.msra.mxu0 %v1226
    %1326 = vmatmul.f32.gmra.mxu0 %v1308
    %v1327 = vpop.f32.mrf.mxu0
    %v1328 = vadd.f32 %v1237, %v1327
    %1329 = vdwg.mxu0
    %v1331 = vrot.slane %v1328, 1
    %1333 = vst.msk [vmem:[#allocation2 + $0x1] sm:$0x1] %vm1266, %v1328
    %1334 = vst.msk [vmem:[#allocation2 + $0x9] sm:$0x1] %vm1266, %v1331
    %v1335 = vld [vmem:[%s0 + $0x1] sm:$0x1]
    %v1336 = vld [vmem:[%s0 + $0x9] sm:$0x1]
    %v1339 = vrot.slane %v1336, 7
    %v1340 = vsel %vm75, %v1339, %v1335
    %v1341 = vsel %vm82, %v1340, 0
    %1343 = vmatpush.msra.mxu0 0.0
    %1344 = vmatpush.msra.mxu0 0.0
    %1345 = vmatpush.msra.mxu0 0.0
    %1346 = vmatpush.msra.mxu0 0.0
    %1347 = vmatpush.msra.mxu0 0.0
    %1348 = vmatpush.msra.mxu0 0.0
    %1349 = vmatpush.msra.mxu0 0.0
    %1350 = vmatpush.msra.mxu0 0.0
    %1351 = vmatpush.msra.mxu0 0.0
    %1352 = vmatpush.msra.mxu0 0.0
    %1353 = vmatpush.msra.mxu0 0.0
    %1354 = vmatpush.msra.mxu0 0.0
    %1355 = vmatpush.msra.mxu0 %v1234
    %1356 = vmatpush.msra.mxu0 %v1233
    %1357 = vmatpush.msra.mxu0 %v1232
    %1358 = vmatpush.msra.mxu0 %v1231
    %1359 = vmatmul.f32.gmra.mxu0 %v1341
    %v1360 = vpop.f32.mrf.mxu0
    %v1361 = vadd.f32 %v1272, %v1360
    %1362 = vdwg.mxu0
    %v1364 = vrot.slane %v1361, 1
    %1366 = vst.msk [vmem:[#allocation4 + $0x1] sm:$0x1] %vm1303, %v1361
    %1367 = vst.msk [vmem:[#allocation4 + $0x9] sm:$0x1] %vm1303, %v1364
    %1368 = vrot.lane.b32.xlu0 %v876, 64
    %v1369 = vpop.permute.xlu0 %1368
    %v1370 = vsel %vm82, %v1369, 0
    %1372 = vmatpush.msra.mxu0 0.0
    %1373 = vmatpush.msra.mxu0 0.0
    %1374 = vmatpush.msra.mxu0 0.0
    %1375 = vmatpush.msra.mxu0 0.0
    %1376 = vmatpush.msra.mxu0 0.0
    %1377 = vmatpush.msra.mxu0 0.0
    %1378 = vmatpush.msra.mxu0 0.0
    %1379 = vmatpush.msra.mxu0 0.0
    %1380 = vmatpush.msra.mxu0 0.0
    %1381 = vmatpush.msra.mxu0 0.0
    %1382 = vmatpush.msra.mxu0 0.0
    %1383 = vmatpush.msra.mxu0 0.0
    %1384 = vmatpush.msra.mxu0 %v1229
    %1385 = vmatpush.msra.mxu0 %v1228
    %1386 = vmatpush.msra.mxu0 %v1227
    %1387 = vmatpush.msra.mxu0 %v1226
    %1388 = vmatmul.f32.gmra.mxu0 %v1370
    %v1389 = vpop.f32.mrf.mxu0
    %v1390 = vadd.f32 %v1237, %v1389
    %1391 = vdwg.mxu0
    %v1393 = vrot.slane %v1390, 1
    %1395 = vst.msk [vmem:[#allocation2 + $0x2] sm:$0x1] %vm1266, %v1390
    %1396 = vst.msk [vmem:[#allocation2 + $0xa] sm:$0x1] %vm1266, %v1393
    %v1397 = vld [vmem:[%s0 + $0x2] sm:$0x1]
    %v1398 = vld [vmem:[%s0 + $0xa] sm:$0x1]
    %v1401 = vrot.slane %v1398, 7
    %v1402 = vsel %vm75, %v1401, %v1397
    %v1403 = vsel %vm82, %v1402, 0
    %1405 = vmatpush.msra.mxu0 0.0
    %1406 = vmatpush.msra.mxu0 0.0
    %1407 = vmatpush.msra.mxu0 0.0
    %1408 = vmatpush.msra.mxu0 0.0
    %1409 = vmatpush.msra.mxu0 0.0
    %1410 = vmatpush.msra.mxu0 0.0
    %1411 = vmatpush.msra.mxu0 0.0
    %1412 = vmatpush.msra.mxu0 0.0
    %1413 = vmatpush.msra.mxu0 0.0
    %1414 = vmatpush.msra.mxu0 0.0
    %1415 = vmatpush.msra.mxu0 0.0
    %1416 = vmatpush.msra.mxu0 0.0
    %1417 = vmatpush.msra.mxu0 %v1234
    %1418 = vmatpush.msra.mxu0 %v1233
    %1419 = vmatpush.msra.mxu0 %v1232
    %1420 = vmatpush.msra.mxu0 %v1231
    %1421 = vmatmul.f32.gmra.mxu0 %v1403
    %v1422 = vpop.f32.mrf.mxu0
    %v1423 = vadd.f32 %v1272, %v1422
    %1424 = vdwg.mxu0
    %v1426 = vrot.slane %v1423, 1
    %1428 = vst.msk [vmem:[#allocation4 + $0x2] sm:$0x1] %vm1303, %v1423
    %1429 = vst.msk [vmem:[#allocation4 + $0xa] sm:$0x1] %vm1303, %v1426
    %1430 = vrot.lane.b32.xlu0 %v944, 64
    %v1431 = vpop.permute.xlu0 %1430
    %v1432 = vsel %vm82, %v1431, 0
    %1434 = vmatpush.msra.mxu0 0.0
    %1435 = vmatpush.msra.mxu0 0.0
    %1436 = vmatpush.msra.mxu0 0.0
    %1437 = vmatpush.msra.mxu0 0.0
    %1438 = vmatpush.msra.mxu0 0.0
    %1439 = vmatpush.msra.mxu0 0.0
    %1440 = vmatpush.msra.mxu0 0.0
    %1441 = vmatpush.msra.mxu0 0.0
    %1442 = vmatpush.msra.mxu0 0.0
    %1443 = vmatpush.msra.mxu0 0.0
    %1444 = vmatpush.msra.mxu0 0.0
    %1445 = vmatpush.msra.mxu0 0.0
    %1446 = vmatpush.msra.mxu0 %v1229
    %1447 = vmatpush.msra.mxu0 %v1228
    %1448 = vmatpush.msra.mxu0 %v1227
    %1449 = vmatpush.msra.mxu0 %v1226
    %1450 = vmatmul.f32.gmra.mxu0 %v1432
    %v1451 = vpop.f32.mrf.mxu0
    %v1452 = vadd.f32 %v1237, %v1451
    %1453 = vdwg.mxu0
    %v1455 = vrot.slane %v1452, 1
    %1457 = vst.msk [vmem:[#allocation2 + $0x3] sm:$0x1] %vm1266, %v1452
    %1458 = vst.msk [vmem:[#allocation2 + $0xb] sm:$0x1] %vm1266, %v1455
    %v1459 = vld [vmem:[%s0 + $0x3] sm:$0x1]
    %v1460 = vld [vmem:[%s0 + $0xb] sm:$0x1]
    %v1463 = vrot.slane %v1460, 7
    %v1464 = vsel %vm75, %v1463, %v1459
    %v1465 = vsel %vm82, %v1464, 0
    %1467 = vmatpush.msra.mxu0 0.0
    %1468 = vmatpush.msra.mxu0 0.0
    %1469 = vmatpush.msra.mxu0 0.0
    %1470 = vmatpush.msra.mxu0 0.0
    %1471 = vmatpush.msra.mxu0 0.0
    %1472 = vmatpush.msra.mxu0 0.0
    %1473 = vmatpush.msra.mxu0 0.0
    %1474 = vmatpush.msra.mxu0 0.0
    %1475 = vmatpush.msra.mxu0 0.0
    %1476 = vmatpush.msra.mxu0 0.0
    %1477 = vmatpush.msra.mxu0 0.0
    %1478 = vmatpush.msra.mxu0 0.0
    %1479 = vmatpush.msra.mxu0 %v1234
    %1480 = vmatpush.msra.mxu0 %v1233
    %1481 = vmatpush.msra.mxu0 %v1232
    %1482 = vmatpush.msra.mxu0 %v1231
    %1483 = vmatmul.f32.gmra.mxu0 %v1465
    %v1484 = vpop.f32.mrf.mxu0
    %v1485 = vadd.f32 %v1272, %v1484
    %1486 = vdwg.mxu0
    %v1488 = vrot.slane %v1485, 1
    %1490 = vst.msk [vmem:[#allocation4 + $0x3] sm:$0x1] %vm1303, %v1485
    %1491 = vst.msk [vmem:[#allocation4 + $0xb] sm:$0x1] %vm1303, %v1488
    %1492 = vrot.lane.b32.xlu0 %v1012, 64
    %v1493 = vpop.permute.xlu0 %1492
    %v1494 = vsel %vm82, %v1493, 0
    %1496 = vmatpush.msra.mxu0 0.0
    %1497 = vmatpush.msra.mxu0 0.0
    %1498 = vmatpush.msra.mxu0 0.0
    %1499 = vmatpush.msra.mxu0 0.0
    %1500 = vmatpush.msra.mxu0 0.0
    %1501 = vmatpush.msra.mxu0 0.0
    %1502 = vmatpush.msra.mxu0 0.0
    %1503 = vmatpush.msra.mxu0 0.0
    %1504 = vmatpush.msra.mxu0 0.0
    %1505 = vmatpush.msra.mxu0 0.0
    %1506 = vmatpush.msra.mxu0 0.0
    %1507 = vmatpush.msra.mxu0 0.0
    %1508 = vmatpush.msra.mxu0 %v1229
    %1509 = vmatpush.msra.mxu0 %v1228
    %1510 = vmatpush.msra.mxu0 %v1227
    %1511 = vmatpush.msra.mxu0 %v1226
    %1512 = vmatmul.f32.gmra.mxu0 %v1494
    %v1513 = vpop.f32.mrf.mxu0
    %v1514 = vadd.f32 %v1237, %v1513
    %1515 = vdwg.mxu0
    %v1517 = vrot.slane %v1514, 1
    %1519 = vst.msk [vmem:[#allocation2 + $0x4] sm:$0x1] %vm1266, %v1514
    %1520 = vst.msk [vmem:[#allocation2 + $0xc] sm:$0x1] %vm1266, %v1517
    %v1521 = vld [vmem:[%s0 + $0x4] sm:$0x1]
    %v1522 = vld [vmem:[%s0 + $0xc] sm:$0x1]
    %v1525 = vrot.slane %v1522, 7
    %v1526 = vsel %vm75, %v1525, %v1521
    %v1527 = vsel %vm82, %v1526, 0
    %1529 = vmatpush.msra.mxu0 0.0
    %1530 = vmatpush.msra.mxu0 0.0
    %1531 = vmatpush.msra.mxu0 0.0
    %1532 = vmatpush.msra.mxu0 0.0
    %1533 = vmatpush.msra.mxu0 0.0
    %1534 = vmatpush.msra.mxu0 0.0
    %1535 = vmatpush.msra.mxu0 0.0
    %1536 = vmatpush.msra.mxu0 0.0
    %1537 = vmatpush.msra.mxu0 0.0
    %1538 = vmatpush.msra.mxu0 0.0
    %1539 = vmatpush.msra.mxu0 0.0
    %1540 = vmatpush.msra.mxu0 0.0
    %1541 = vmatpush.msra.mxu0 %v1234
    %1542 = vmatpush.msra.mxu0 %v1233
    %1543 = vmatpush.msra.mxu0 %v1232
    %1544 = vmatpush.msra.mxu0 %v1231
    %1545 = vmatmul.f32.gmra.mxu0 %v1527
    %v1546 = vpop.f32.mrf.mxu0
    %v1547 = vadd.f32 %v1272, %v1546
    %1548 = vdwg.mxu0
    %v1550 = vrot.slane %v1547, 1
    %1552 = vst.msk [vmem:[#allocation4 + $0x4] sm:$0x1] %vm1303, %v1547
    %1553 = vst.msk [vmem:[#allocation4 + $0xc] sm:$0x1] %vm1303, %v1550
    %1554 = vrot.lane.b32.xlu0 %v1080, 64
    %v1555 = vpop.permute.xlu0 %1554
    %v1556 = vsel %vm82, %v1555, 0
    %1558 = vmatpush.msra.mxu0 0.0
    %1559 = vmatpush.msra.mxu0 0.0
    %1560 = vmatpush.msra.mxu0 0.0
    %1561 = vmatpush.msra.mxu0 0.0
    %1562 = vmatpush.msra.mxu0 0.0
    %1563 = vmatpush.msra.mxu0 0.0
    %1564 = vmatpush.msra.mxu0 0.0
    %1565 = vmatpush.msra.mxu0 0.0
    %1566 = vmatpush.msra.mxu0 0.0
    %1567 = vmatpush.msra.mxu0 0.0
    %1568 = vmatpush.msra.mxu0 0.0
    %1569 = vmatpush.msra.mxu0 0.0
    %1570 = vmatpush.msra.mxu0 %v1229
    %1571 = vmatpush.msra.mxu0 %v1228
    %1572 = vmatpush.msra.mxu0 %v1227
    %1573 = vmatpush.msra.mxu0 %v1226
    %1574 = vmatmul.f32.gmra.mxu0 %v1556
    %v1575 = vpop.f32.mrf.mxu0
    %v1576 = vadd.f32 %v1237, %v1575
    %1577 = vdwg.mxu0
    %v1579 = vrot.slane %v1576, 1
    %1581 = vst.msk [vmem:[#allocation2 + $0x5] sm:$0x1] %vm1266, %v1576
    %1582 = vst.msk [vmem:[#allocation2 + $0xd] sm:$0x1] %vm1266, %v1579
    %v1583 = vld [vmem:[%s0 + $0x5] sm:$0x1]
    %v1584 = vld [vmem:[%s0 + $0xd] sm:$0x1]
    %v1587 = vrot.slane %v1584, 7
    %v1588 = vsel %vm75, %v1587, %v1583
    %v1589 = vsel %vm82, %v1588, 0
    %1591 = vmatpush.msra.mxu0 0.0
    %1592 = vmatpush.msra.mxu0 0.0
    %1593 = vmatpush.msra.mxu0 0.0
    %1594 = vmatpush.msra.mxu0 0.0
    %1595 = vmatpush.msra.mxu0 0.0
    %1596 = vmatpush.msra.mxu0 0.0
    %1597 = vmatpush.msra.mxu0 0.0
    %1598 = vmatpush.msra.mxu0 0.0
    %1599 = vmatpush.msra.mxu0 0.0
    %1600 = vmatpush.msra.mxu0 0.0
    %1601 = vmatpush.msra.mxu0 0.0
    %1602 = vmatpush.msra.mxu0 0.0
    %1603 = vmatpush.msra.mxu0 %v1234
    %1604 = vmatpush.msra.mxu0 %v1233
    %1605 = vmatpush.msra.mxu0 %v1232
    %1606 = vmatpush.msra.mxu0 %v1231
    %1607 = vmatmul.f32.gmra.mxu0 %v1589
    %v1608 = vpop.f32.mrf.mxu0
    %v1609 = vadd.f32 %v1272, %v1608
    %1610 = vdwg.mxu0
    %v1612 = vrot.slane %v1609, 1
    %1614 = vst.msk [vmem:[#allocation4 + $0x5] sm:$0x1] %vm1303, %v1609
    %1615 = vst.msk [vmem:[#allocation4 + $0xd] sm:$0x1] %vm1303, %v1612
    %1616 = vrot.lane.b32.xlu0 %v1148, 64
    %v1617 = vpop.permute.xlu0 %1616
    %v1618 = vsel %vm82, %v1617, 0
    %1620 = vmatpush.msra.mxu0 0.0
    %1621 = vmatpush.msra.mxu0 0.0
    %1622 = vmatpush.msra.mxu0 0.0
    %1623 = vmatpush.msra.mxu0 0.0
    %1624 = vmatpush.msra.mxu0 0.0
    %1625 = vmatpush.msra.mxu0 0.0
    %1626 = vmatpush.msra.mxu0 0.0
    %1627 = vmatpush.msra.mxu0 0.0
    %1628 = vmatpush.msra.mxu0 0.0
    %1629 = vmatpush.msra.mxu0 0.0
    %1630 = vmatpush.msra.mxu0 0.0
    %1631 = vmatpush.msra.mxu0 0.0
    %1632 = vmatpush.msra.mxu0 %v1229
    %1633 = vmatpush.msra.mxu0 %v1228
    %1634 = vmatpush.msra.mxu0 %v1227
    %1635 = vmatpush.msra.mxu0 %v1226
    %1636 = vmatmul.f32.gmra.mxu0 %v1618
    %v1637 = vpop.f32.mrf.mxu0
    %v1638 = vadd.f32 %v1237, %v1637
    %1639 = vdwg.mxu0
    %v1641 = vrot.slane %v1638, 1
    %1643 = vst.msk [vmem:[#allocation2 + $0x6] sm:$0x1] %vm1266, %v1638
    %1644 = vst.msk [vmem:[#allocation2 + $0xe] sm:$0x1] %vm1266, %v1641
    %v1645 = vld [vmem:[%s0 + $0x6] sm:$0x1]
    %v1646 = vld [vmem:[%s0 + $0xe] sm:$0x1]
    %v1649 = vrot.slane %v1646, 7
    %v1650 = vsel %vm75, %v1649, %v1645
    %v1651 = vsel %vm82, %v1650, 0
    %1653 = vmatpush.msra.mxu0 0.0
    %1654 = vmatpush.msra.mxu0 0.0
    %1655 = vmatpush.msra.mxu0 0.0
    %1656 = vmatpush.msra.mxu0 0.0
    %1657 = vmatpush.msra.mxu0 0.0
    %1658 = vmatpush.msra.mxu0 0.0
    %1659 = vmatpush.msra.mxu0 0.0
    %1660 = vmatpush.msra.mxu0 0.0
    %1661 = vmatpush.msra.mxu0 0.0
    %1662 = vmatpush.msra.mxu0 0.0
    %1663 = vmatpush.msra.mxu0 0.0
    %1664 = vmatpush.msra.mxu0 0.0
    %1665 = vmatpush.msra.mxu0 %v1234
    %1666 = vmatpush.msra.mxu0 %v1233
    %1667 = vmatpush.msra.mxu0 %v1232
    %1668 = vmatpush.msra.mxu0 %v1231
    %1669 = vmatmul.f32.gmra.mxu0 %v1651
    %v1670 = vpop.f32.mrf.mxu0
    %v1671 = vadd.f32 %v1272, %v1670
    %1672 = vdwg.mxu0
    %v1674 = vrot.slane %v1671, 1
    %1676 = vst.msk [vmem:[#allocation4 + $0x6] sm:$0x1] %vm1303, %v1671
    %1677 = vst.msk [vmem:[#allocation4 + $0xe] sm:$0x1] %vm1303, %v1674
    %v1678 = vsel %vm82, %v1216, 0
    %1680 = vmatpush.msra.mxu0 0.0
    %1681 = vmatpush.msra.mxu0 0.0
    %1682 = vmatpush.msra.mxu0 0.0
    %1683 = vmatpush.msra.mxu0 0.0
    %1684 = vmatpush.msra.mxu0 0.0
    %1685 = vmatpush.msra.mxu0 0.0
    %1686 = vmatpush.msra.mxu0 0.0
    %1687 = vmatpush.msra.mxu0 0.0
    %1688 = vmatpush.msra.mxu0 0.0
    %1689 = vmatpush.msra.mxu0 0.0
    %1690 = vmatpush.msra.mxu0 0.0
    %1691 = vmatpush.msra.mxu0 0.0
    %1692 = vmatpush.msra.mxu0 %v1229
    %1693 = vmatpush.msra.mxu0 %v1228
    %1694 = vmatpush.msra.mxu0 %v1227
    %1695 = vmatpush.msra.mxu0 %v1226
    %1696 = vmatmul.f32.gmra.mxu0 %v1678
    %v1697 = vpop.f32.mrf.mxu0
    %v1698 = vadd.f32 %v1237, %v1697
    %1699 = vdwg.mxu0
    %v1701 = vrot.slane %v1698, 1
    %1703 = vst.msk [vmem:[#allocation2 + $0x7] sm:$0x1] %vm1266, %v1698
    %1704 = vst.msk [vmem:[#allocation2 + $0xf] sm:$0x1] %vm1266, %v1701
    %v1705 = vld [vmem:[%s0 + $0x7] sm:$0x1]
    %v1706 = vld [vmem:[%s0 + $0xf] sm:$0x1]
    %v1709 = vrot.slane %v1706, 7
    %v1710 = vsel %vm75, %v1709, %v1705
    %v1711 = vsel %vm82, %v1710, 0
    %1713 = vmatpush.msra.mxu0 0.0
    %1714 = vmatpush.msra.mxu0 0.0
    %1715 = vmatpush.msra.mxu0 0.0
    %1716 = vmatpush.msra.mxu0 0.0
    %1717 = vmatpush.msra.mxu0 0.0
    %1718 = vmatpush.msra.mxu0 0.0
    %1719 = vmatpush.msra.mxu0 0.0
    %1720 = vmatpush.msra.mxu0 0.0
    %1721 = vmatpush.msra.mxu0 0.0
    %1722 = vmatpush.msra.mxu0 0.0
    %1723 = vmatpush.msra.mxu0 0.0
    %1724 = vmatpush.msra.mxu0 0.0
    %1725 = vmatpush.msra.mxu0 %v1234
    %1726 = vmatpush.msra.mxu0 %v1233
    %1727 = vmatpush.msra.mxu0 %v1232
    %1728 = vmatpush.msra.mxu0 %v1231
    %1729 = vmatmul.f32.gmra.mxu0 %v1711
    %v1730 = vpop.f32.mrf.mxu0
    %v1731 = vadd.f32 %v1272, %v1730
    %1732 = vdwg.mxu0
    %v1734 = vrot.slane %v1731, 1
    %1736 = vst.msk [vmem:[#allocation4 + $0x7] sm:$0x1] %vm1303, %v1731
    %1737 = vst.msk [vmem:[#allocation4 + $0xf] sm:$0x1] %vm1303, %v1734
    // Predicated region
    $region46: #{model_forward.1} parent=1 // pred_check
      _
    $region47: #{model_forward.1} parent=1 // pred_check_branch
      %1739 = sbr.rel (0) target = $region49
    $region48: #{model_forward.1} parent=1 // pred_region
      %1741 = vsyncadd [#allocation3], 0
      %s1742 = sshll.u32 [#allocation2], 4
      %s1743 = int_to_ptr.vmem [resolvable:$true] %s1742
      %s1744 = sshll.u32 %s11, 4
      %s1745 = int_to_ptr.hbm [resolvable:$true] %s1744
      %1750 = dma.vmem_to_hbm [thread:$0]  %s1743, 256, %s1745, [#allocation3], 128, 128, 8
    $region49: #{model_forward.1} parent=1 // pred_fallthru
      _
    // Predicated region
    $region50: #{model_forward.1} parent=1 // pred_check
      _
    $region51: #{model_forward.1} parent=1 // pred_check_branch
      %1752 = sbr.rel (0) target = $region53
    $region52: #{model_forward.1} parent=1 // pred_region
      %1754 = vsyncadd [#allocation5], 0
      %s1755 = sshll.u32 [#allocation4], 4
      %s1756 = int_to_ptr.vmem [resolvable:$true] %s1755
      %s1757 = sshll.u32 %s12, 4
      %s1758 = int_to_ptr.hbm [resolvable:$true] %s1757
      %1763 = dma.vmem_to_hbm [thread:$0]  %s1756, 256, %s1758, [#allocation5], 128, 128, 8
    $region53: #{model_forward.1} parent=1 // pred_fallthru
      _
    // Predicated region
    $region54: #{model_forward.1} parent=1 // pred_check
      _
    $region55: #{model_forward.1} parent=1 // pred_check_branch
      %1765 = sbr.rel (0) target = $region57
    $region56: #{model_forward.1} parent=1 // pred_region
      %1767 = vsyncadd [#allocation5], 0
      %s1768 = sshll.u32 [#allocation6], 4
      %s1769 = int_to_ptr.vmem [resolvable:$true] %s1768
      %s1770 = sshll.u32 %s13, 4
      %s1771 = int_to_ptr.hbm [resolvable:$true] %s1770
      %1776 = dma.vmem_to_hbm [thread:$0]  %s1769, 64, %s1771, [#allocation5], 32, 32, 2
    $region57: #{model_forward.1} parent=1 // pred_fallthru
      _
    // Predicated region
    $region58: #{model_forward.1} parent=1 // pred_check
      _
    $region59: #{model_forward.1} parent=1 // pred_check_branch
      %1778 = sbr.rel (0) target = $region61
    $region60: #{model_forward.1} parent=1 // pred_region
      %1780 = vsyncadd [#allocation8], 0
      %s1781 = sshll.u32 [#allocation7], 4
      %s1782 = int_to_ptr.vmem [resolvable:$true] %s1781
      %s1783 = sshll.u32 %s14, 4
      %s1784 = int_to_ptr.hbm [resolvable:$true] %s1783
      %1789 = dma.vmem_to_hbm [thread:$0]  %s1782, 64, %s1784, [#allocation8], 32, 32, 2
    $region61: #{model_forward.1} parent=1 // pred_fallthru
      _
    // Predicated region
    $region62: #{model_forward.1} parent=1 // pred_check
      _
    $region63: #{model_forward.1} parent=1 // pred_check_branch
      %1791 = sbr.rel (0) target = $region65
    $region64: #{model_forward.1} parent=1 // pred_region
      %1793 = dma.done [#allocation3], 256
    $region65: #{model_forward.1} parent=1 // pred_fallthru
      _
    // Predicated region
    $region66: #{model_forward.1} parent=1 // pred_check
      _
    $region67: #{model_forward.1} parent=1 // pred_check_branch
      %1795 = sbr.rel (0) target = $region69
    $region68: #{model_forward.1} parent=1 // pred_region
      %1797 = dma.done [#allocation5], 256
    $region69: #{model_forward.1} parent=1 // pred_fallthru
      _
    // Predicated region
    $region70: #{model_forward.1} parent=1 // pred_check
      _
    $region71: #{model_forward.1} parent=1 // pred_check_branch
      %1799 = sbr.rel (0) target = $region73
    $region72: #{model_forward.1} parent=1 // pred_region
      %1801 = dma.done [#allocation5], 64
    $region73: #{model_forward.1} parent=1 // pred_fallthru
      _
    // Predicated region
    $region74: #{model_forward.1} parent=1 // pred_check
      _
    $region75: #{model_forward.1} parent=1 // pred_check_branch
      %1803 = sbr.rel (0) target = $region77
    $region76: #{model_forward.1} parent=1 // pred_region
      %1805 = dma.done [#allocation8], 64
    $region77: #{model_forward.1} parent=1 // pred_fallthru
      _
    %1806 = vsyncpa [#allocation3], 1
    %1807 = vsyncpa [#allocation5], 1
    %1808 = vsyncpa [#allocation8], 1

</llo_original>
